<compile_context>
chip_gen: v7x
topology: tpu7x:2x2x1
jax: 0.10.0
libtpu: 0.0.40
codegen_flags: <defaults>
</compile_context>

<pallas_src>
import jax
import jax.numpy as jnp
from jax.experimental import pallas as pl
from jax.experimental.pallas import tpu as pltpu

_LANE = 128
_SUBLANE = 8


def _round_up(n, m):
    return ((n + m - 1) // m) * m


def _tpu_generation_info():
    """(is_v5e, is_v7x, physical_vmem_bytes) with conservative fallbacks."""
    kind = ""
    try:
        kind = jax.devices()[0].device_kind.lower()
    except Exception:
        pass
    is_v5e = ("v5e" in kind) or ("v5 lite" in kind) or ("v5lite" in kind)
    is_v7 = "v7" in kind
    vmem = None
    try:
        vmem = int(pltpu.get_tpu_info().vmem_capacity_bytes)
    except Exception:
        vmem = None
    if vmem is None or vmem <= 0:
        vmem = (64 << 20) if is_v7 else (128 << 20)
    return is_v5e, is_v7, vmem


def _leaky_relu(x, slope=0.2):
    return jnp.where(x > 0, x, slope * x)


def _generator_kernel(x_ref,
                      w1_ref, b1_ref,
                      w2_ref, b2_ref,
                      w3_ref, b3_ref,
                      w4_ref, b4_ref,
                      o_ref):
    # Dots: bf16 x bf16 -> f32 accumulation on the MXU.
    # Epilogues (bias / LeakyReLU / tanh) run in the biases' dtype:
    #   bf16 on v6e/v7x (halves VALU work, bf16 EUP tanh), f32 on v5e.
    b1 = b1_ref[...]
    b2 = b2_ref[...]
    b3 = b3_ref[...]
    b4 = b4_ref[...]
    cdt = b1.dtype

    h = jnp.dot(x_ref[...], w1_ref[...], preferred_element_type=jnp.float32)
    h = _leaky_relu(h.astype(cdt) + b1)
    h = jnp.dot(h.astype(jnp.bfloat16), w2_ref[...],
                preferred_element_type=jnp.float32)
    h = _leaky_relu(h.astype(cdt) + b2)
    h = jnp.dot(h.astype(jnp.bfloat16), w3_ref[...],
                preferred_element_type=jnp.float32)
    h = _leaky_relu(h.astype(cdt) + b3)
    h = jnp.dot(h.astype(jnp.bfloat16), w4_ref[...],
                preferred_element_type=jnp.float32)
    h = jnp.tanh(h.astype(cdt) + b4)
    o_ref[...] = h.astype(o_ref.dtype)


def pack_params(params, *, epilogue_dtype=None):
    """One-time prep: transpose W to (in, out), zero-pad all dims to multiples
    of 128, cast weights to bf16. Biases are (1, N) rows in the epilogue
    dtype (bf16 on v6e/v7x, f32 on v5e)."""
    if epilogue_dtype is None:
        is_v5e, _, _ = _tpu_generation_info()
        epilogue_dtype = jnp.float32 if is_v5e else jnp.bfloat16
    packed = {}
    for i in range(1, 5):
        w = params[f"W{i}"]            # PyTorch layout: (out, in)
        b = params[f"b{i}"]            # (out,)
        fan_out, fan_in = w.shape
        in_p = _round_up(fan_in, _LANE)
        out_p = _round_up(fan_out, _LANE)
        w_t = jnp.zeros((in_p, out_p), jnp.float32).at[:fan_in, :fan_out].set(w.T)
        b_p = jnp.zeros((1, out_p), jnp.float32).at[0, :fan_out].set(b)
        packed[f"W{i}"] = w_t.astype(jnp.bfloat16)
        packed[f"b{i}"] = b_p.astype(epilogue_dtype)
    return packed


def vanilla_gan_generator(x, packed, output_shape, *, b_tile=None,
                          out_dtype=jnp.bfloat16):
    """x: (B, latent_dim) f32. packed: output of pack_params.
    Returns NCHW (B, C, H, W) in `out_dtype` (bf16 by default; tanh output)."""
    B, latent_dim = x.shape
    out_dim = output_shape[0] * output_shape[1] * output_shape[2]

    k1p = packed["W1"].shape[0]                      # padded latent dim
    widths = [packed[f"W{i}"].shape[1] for i in range(1, 5)]
    n4p = widths[-1]                                 # padded output dim

    is_v5e, is_v7, vmem_phys = _tpu_generation_info()

    bias_itemsize = jnp.dtype(packed["b1"].dtype).itemsize
    out_itemsize = jnp.dtype(out_dtype).itemsize
    resident_bytes = sum(packed[f"W{i}"].size * 2
                         + packed[f"b{i}"].size * bias_itemsize
                         for i in range(1, 5))
    # Per-batch-row VMEM: 2 pipelined bf16 x buffers, 2 pipelined out buffers,
    # plus f32 dot results + low-precision epilogue copies per layer.
    per_row = (2 * 2 * k1p
               + 2 * out_itemsize * n4p
               + 6 * sum(widths))

    # --- batch tile: multiple of 128 (full MXU M, unmasked bf16 tiles),
    #     sized against the chip's actual VMEM. ---
    bp128 = _round_up(B, _LANE)
    budget = int(vmem_phys * 0.6)
    if b_tile is None:
        b_tile = _LANE
        for t in (512, 256, 128):
            if t <= bp128 and 2 * resident_bytes + per_row * t <= budget:
                b_tile = t
                break
        if is_v7 and bp128 >= 2 * _LANE:
            # Keep >=2 grid steps so both v7x TensorCores get work.
            b_tile = min(b_tile, max(_LANE, (bp128 // 2) // _LANE * _LANE))
    b_tile = max(_LANE, (int(b_tile) // _LANE) * _LANE)
    b_tile = min(b_tile, bp128)
    bp = _round_up(B, b_tile)

    vmem_need = 2 * resident_bytes + per_row * b_tile + (8 << 20)
    vmem_limit = int(min(vmem_phys - (16 << 20), max(vmem_need, 32 << 20)))
    vmem_limit = max(vmem_limit, 16 << 20)

    # Pad batch + latent dim with zeros, directly in bf16 (no f32 round trip).
    x_pad = jnp.zeros((bp, k1p), jnp.bfloat16).at[:B, :latent_dim].set(
        x.astype(jnp.bfloat16))

    operands = (x_pad,
                packed["W1"], packed["b1"],
                packed["W2"], packed["b2"],
                packed["W3"], packed["b3"],
                packed["W4"], packed["b4"])

    dims_in = [packed[f"W{i}"].shape[0] for i in range(1, 5)]
    flops = 2 * bp * sum(k * n for k, n in zip(dims_in, widths))
    bytes_accessed = (x_pad.size * 2
                      + int(resident_bytes)
                      + bp * n4p * out_itemsize)

    def make_call(single_buffer_weights):
        if single_buffer_weights:
            # Constant index_map -> the block never changes; 1 buffer suffices.
            resident = lambda a: pl.BlockSpec(a.shape, lambda i: (0,) * a.ndim,
                                              pipeline_mode=pl.Buffered(1))
        else:
            resident = lambda a: pl.BlockSpec(a.shape, lambda i: (0,) * a.ndim)
        in_specs = ([pl.BlockSpec((b_tile, k1p), lambda i: (i, 0))]
                    + [resident(a) for a in operands[1:]])
        return pl.pallas_call(
            _generator_kernel,
            out_shape=jax.ShapeDtypeStruct((bp, n4p), out_dtype),
            grid_spec=pltpu.PrefetchScalarGridSpec(
                num_scalar_prefetch=0,
                grid=(bp // b_tile,),
                in_specs=in_specs,
                out_specs=pl.BlockSpec((b_tile, n4p), lambda i: (i, 0)),
            ),
            compiler_params=pltpu.CompilerParams(
                dimension_semantics=("parallel",),
                vmem_limit_bytes=vmem_limit),
            cost_estimate=pl.CostEstimate(
                flops=int(flops),
                transcendentals=int(bp * n4p),
                bytes_accessed=int(bytes_accessed)),
        )

    try:
        flat = jax.block_until_ready(make_call(True)(*operands))
    except Exception:
        # Fallback if this jax build rejects single-buffered (Buffered(1)) specs.
        flat = make_call(False)(*operands)

    # Drop batch/lane padding (on bf16 data), then NCHW view matching
    # x.view((-1,) + output_shape). No-op when B == bp and out_dim == n4p.
    return flat[:B, :out_dim].reshape((-1,) + tuple(output_shape))


def init_params(key, latent_dim, hidden_dim, output_shape):
    """Deterministic synthetic init (PyTorch nn.Linear shapes: W is (out,in))."""
    dims = [
        (hidden_dim, latent_dim),
        (hidden_dim * 2, hidden_dim),
        (hidden_dim * 4, hidden_dim * 2),
        (output_shape[0] * output_shape[1] * output_shape[2], hidden_dim * 4),
    ]
    params = {}
    for i, (fan_out, fan_in) in enumerate(dims, start=1):
        key, kw, kb = jax.random.split(key, 3)
        bound = 1.0 / jnp.sqrt(fan_in)
        params[f"W{i}"] = jax.random.uniform(
            kw, (fan_out, fan_in), jnp.float32, -bound, bound)
        params[f"b{i}"] = jax.random.uniform(
            kb, (fan_out,), jnp.float32, -bound, bound)
    return params


def reference_forward(x, params, output_shape):
    """Pure-JAX f32 reference mirroring the PyTorch module."""
    act = lambda v: jnp.where(v > 0, v, 0.2 * v)
    h = act(x @ params["W1"].T + params["b1"])
    h = act(h @ params["W2"].T + params["b2"])
    h = act(h @ params["W3"].T + params["b3"])
    h = jnp.tanh(h @ params["W4"].T + params["b4"])
    return h.reshape((-1,) + tuple(output_shape))


if __name__ == "__main__":
    latent_dim = 8
    hidden_dim = 32
    output_shape = (1, 8, 8)   # (C, H, W) -> flat dim 64
    batch = 2

    key = jax.random.PRNGKey(0)
    key, kx = jax.random.split(key)
    x = jax.random.normal(kx, (batch, latent_dim), dtype=jnp.float32)
    params = init_params(key, latent_dim, hidden_dim, output_shape)

    packed = pack_params(params)               # one-time packing (not per call)
    out = vanilla_gan_generator(x, packed, output_shape)
    out = jax.block_until_ready(out)

    ref = reference_forward(x, params, output_shape)
    assert out.shape == (batch,) + output_shape
    # Matmuls run in bf16 on the MXU (f32 accumulation) and the epilogue /
    # output are bf16 on v6e/v7x, so compare at bf16-appropriate tolerance.
    out_f32 = out.astype(jnp.float32)
    assert jnp.allclose(out_f32, ref, atol=5e-2, rtol=5e-2), float(
        jnp.max(jnp.abs(out_f32 - ref)))

    print("KERNEL_OK")
</pallas_src>

<mosaic_0001>
module attributes {stable_mosaic.version = 11 : i64} {
  func.func @_generator_kernel(%arg0: i32, %arg1: memref<128x128xbf16, #tpu.memory_space<vmem>>, %arg2: memref<128x128xbf16, #tpu.memory_space<vmem>>, %arg3: memref<1x128xbf16, #tpu.memory_space<vmem>>, %arg4: memref<128x128xbf16, #tpu.memory_space<vmem>>, %arg5: memref<1x128xbf16, #tpu.memory_space<vmem>>, %arg6: memref<128x128xbf16, #tpu.memory_space<vmem>>, %arg7: memref<1x128xbf16, #tpu.memory_space<vmem>>, %arg8: memref<128x128xbf16, #tpu.memory_space<vmem>>, %arg9: memref<1x128xbf16, #tpu.memory_space<vmem>>, %arg10: memref<128x128xbf16, #tpu.memory_space<vmem>>) attributes {dimension_semantics = [#tpu.dimension_semantics<parallel>], iteration_bounds = array<i64: 1>, scalar_prefetch = 0 : i64, scratch_operands = 0 : i64, tpu.core_type = #tpu.core_type<tc>, window_params = [{transform_indices = @transform_0, window_bounds = array<i64: 128, 128>}, {pipeline_mode = #tpu.pipeline_mode<synchronous>, transform_indices = @transform_1, window_bounds = array<i64: 128, 128>}, {pipeline_mode = #tpu.pipeline_mode<synchronous>, transform_indices = @transform_2, window_bounds = array<i64: 1, 128>}, {pipeline_mode = #tpu.pipeline_mode<synchronous>, transform_indices = @transform_3, window_bounds = array<i64: 128, 128>}, {pipeline_mode = #tpu.pipeline_mode<synchronous>, transform_indices = @transform_4, window_bounds = array<i64: 1, 128>}, {pipeline_mode = #tpu.pipeline_mode<synchronous>, transform_indices = @transform_5, window_bounds = array<i64: 128, 128>}, {pipeline_mode = #tpu.pipeline_mode<synchronous>, transform_indices = @transform_6, window_bounds = array<i64: 1, 128>}, {pipeline_mode = #tpu.pipeline_mode<synchronous>, transform_indices = @transform_7, window_bounds = array<i64: 128, 128>}, {pipeline_mode = #tpu.pipeline_mode<synchronous>, transform_indices = @transform_8, window_bounds = array<i64: 1, 128>}, {transform_indices = @transform_9, window_bounds = array<i64: 128, 128>}]} {
    %c0 = arith.constant 0 : index
    %c0_0 = arith.constant 0 : index
    %0 = vector.load %arg3[%c0, %c0_0] : memref<1x128xbf16, #tpu.memory_space<vmem>>, vector<1x128xbf16>
    %c0_1 = arith.constant 0 : index
    %c0_2 = arith.constant 0 : index
    %1 = vector.load %arg5[%c0_1, %c0_2] : memref<1x128xbf16, #tpu.memory_space<vmem>>, vector<1x128xbf16>
    %c0_3 = arith.constant 0 : index
    %c0_4 = arith.constant 0 : index
    %2 = vector.load %arg7[%c0_3, %c0_4] : memref<1x128xbf16, #tpu.memory_space<vmem>>, vector<1x128xbf16>
    %c0_5 = arith.constant 0 : index
    %c0_6 = arith.constant 0 : index
    %3 = vector.load %arg9[%c0_5, %c0_6] : memref<1x128xbf16, #tpu.memory_space<vmem>>, vector<1x128xbf16>
    %c0_7 = arith.constant 0 : index
    %c0_8 = arith.constant 0 : index
    %4 = vector.load %arg1[%c0_7, %c0_8] : memref<128x128xbf16, #tpu.memory_space<vmem>>, vector<128x128xbf16>
    %c0_9 = arith.constant 0 : index
    %c0_10 = arith.constant 0 : index
    %5 = vector.load %arg2[%c0_9, %c0_10] : memref<128x128xbf16, #tpu.memory_space<vmem>>, vector<128x128xbf16>
    %cst = arith.constant dense<0.000000e+00> : vector<128x128xf32>
    %6 = tpu.matmul %4, %5, %cst {dimension_numbers = #tpu.dot_dimension_numbers<[1], [0], [0], [1], [0, 0, 1, 1], [], []>} : vector<128x128xbf16>, vector<128x128xbf16>, vector<128x128xf32> -> vector<128x128xf32>
    %7 = arith.truncf %6 : vector<128x128xf32> to vector<128x128xbf16>
    %8 = vector.broadcast %0 : vector<1x128xbf16> to vector<128x128xbf16>
    %9 = arith.addf %7, %8 : vector<128x128xbf16>
    %cst_11 = arith.constant 0.000000e+00 : bf16
    %10 = vector.broadcast %cst_11 : bf16 to vector<128x128xbf16>
    %11 = arith.cmpf ogt, %9, %10 : vector<128x128xbf16>
    %cst_12 = arith.constant 2.001950e-01 : bf16
    %12 = vector.broadcast %cst_12 : bf16 to vector<128x128xbf16>
    %13 = arith.mulf %12, %9 : vector<128x128xbf16>
    %14 = arith.select %11, %9, %13 : vector<128x128xi1>, vector<128x128xbf16>
    %c0_13 = arith.constant 0 : index
    %c0_14 = arith.constant 0 : index
    %15 = vector.load %arg4[%c0_13, %c0_14] : memref<128x128xbf16, #tpu.memory_space<vmem>>, vector<128x128xbf16>
    %cst_15 = arith.constant dense<0.000000e+00> : vector<128x128xf32>
    %16 = tpu.matmul %14, %15, %cst_15 {dimension_numbers = #tpu.dot_dimension_numbers<[1], [0], [0], [1], [0, 0, 1, 1], [], []>} : vector<128x128xbf16>, vector<128x128xbf16>, vector<128x128xf32> -> vector<128x128xf32>
    %17 = arith.truncf %16 : vector<128x128xf32> to vector<128x128xbf16>
    %18 = vector.broadcast %1 : vector<1x128xbf16> to vector<128x128xbf16>
    %19 = arith.addf %17, %18 : vector<128x128xbf16>
    %cst_16 = arith.constant 0.000000e+00 : bf16
    %20 = vector.broadcast %cst_16 : bf16 to vector<128x128xbf16>
    %21 = arith.cmpf ogt, %19, %20 : vector<128x128xbf16>
    %cst_17 = arith.constant 2.001950e-01 : bf16
    %22 = vector.broadcast %cst_17 : bf16 to vector<128x128xbf16>
    %23 = arith.mulf %22, %19 : vector<128x128xbf16>
    %24 = arith.select %21, %19, %23 : vector<128x128xi1>, vector<128x128xbf16>
    %c0_18 = arith.constant 0 : index
    %c0_19 = arith.constant 0 : index
    %25 = vector.load %arg6[%c0_18, %c0_19] : memref<128x128xbf16, #tpu.memory_space<vmem>>, vector<128x128xbf16>
    %cst_20 = arith.constant dense<0.000000e+00> : vector<128x128xf32>
    %26 = tpu.matmul %24, %25, %cst_20 {dimension_numbers = #tpu.dot_dimension_numbers<[1], [0], [0], [1], [0, 0, 1, 1], [], []>} : vector<128x128xbf16>, vector<128x128xbf16>, vector<128x128xf32> -> vector<128x128xf32>
    %27 = arith.truncf %26 : vector<128x128xf32> to vector<128x128xbf16>
    %28 = vector.broadcast %2 : vector<1x128xbf16> to vector<128x128xbf16>
    %29 = arith.addf %27, %28 : vector<128x128xbf16>
    %cst_21 = arith.constant 0.000000e+00 : bf16
    %30 = vector.broadcast %cst_21 : bf16 to vector<128x128xbf16>
    %31 = arith.cmpf ogt, %29, %30 : vector<128x128xbf16>
    %cst_22 = arith.constant 2.001950e-01 : bf16
    %32 = vector.broadcast %cst_22 : bf16 to vector<128x128xbf16>
    %33 = arith.mulf %32, %29 : vector<128x128xbf16>
    %34 = arith.select %31, %29, %33 : vector<128x128xi1>, vector<128x128xbf16>
    %c0_23 = arith.constant 0 : index
    %c0_24 = arith.constant 0 : index
    %35 = vector.load %arg8[%c0_23, %c0_24] : memref<128x128xbf16, #tpu.memory_space<vmem>>, vector<128x128xbf16>
    %cst_25 = arith.constant dense<0.000000e+00> : vector<128x128xf32>
    %36 = tpu.matmul %34, %35, %cst_25 {dimension_numbers = #tpu.dot_dimension_numbers<[1], [0], [0], [1], [0, 0, 1, 1], [], []>} : vector<128x128xbf16>, vector<128x128xbf16>, vector<128x128xf32> -> vector<128x128xf32>
    %37 = arith.truncf %36 : vector<128x128xf32> to vector<128x128xbf16>
    %38 = vector.broadcast %3 : vector<1x128xbf16> to vector<128x128xbf16>
    %39 = arith.addf %37, %38 : vector<128x128xbf16>
    %40 = math.tanh %39 : vector<128x128xbf16>
    %c0_26 = arith.constant 0 : index
    %c0_27 = arith.constant 0 : index
    %41 = vector.load %arg10[%c0_26, %c0_27] : memref<128x128xbf16, #tpu.memory_space<vmem>>, vector<128x128xbf16>
    tpu.vector_store %arg10[%c0_26, %c0_27], %40 {strides = array<i32>} : memref<128x128xbf16, #tpu.memory_space<vmem>>, vector<128x128xbf16>,
    return
  }
  func.func @transform_0(%arg0: i32) -> (i32, i32) {
    %c0_i32 = arith.constant 0 : i32
    %c0_i32_0 = arith.constant 0 : i32
    return %arg0, %c0_i32 : i32, i32
  }
  func.func @transform_1(%arg0: i32) -> (i32, i32) {
    %c0_i32 = arith.constant 0 : i32
    %c0_i32_0 = arith.constant 0 : i32
    %c0_i32_1 = arith.constant 0 : i32
    return %c0_i32, %c0_i32_0 : i32, i32
  }
  func.func @transform_2(%arg0: i32) -> (i32, i32) {
    %c0_i32 = arith.constant 0 : i32
    %c0_i32_0 = arith.constant 0 : i32
    %c0_i32_1 = arith.constant 0 : i32
    return %c0_i32, %c0_i32_0 : i32, i32
  }
  func.func @transform_3(%arg0: i32) -> (i32, i32) {
    %c0_i32 = arith.constant 0 : i32
    %c0_i32_0 = arith.constant 0 : i32
    %c0_i32_1 = arith.constant 0 : i32
    return %c0_i32, %c0_i32_0 : i32, i32
  }
  func.func @transform_4(%arg0: i32) -> (i32, i32) {
    %c0_i32 = arith.constant 0 : i32
    %c0_i32_0 = arith.constant 0 : i32
    %c0_i32_1 = arith.constant 0 : i32
    return %c0_i32, %c0_i32_0 : i32, i32
  }
  func.func @transform_5(%arg0: i32) -> (i32, i32) {
    %c0_i32 = arith.constant 0 : i32
    %c0_i32_0 = arith.constant 0 : i32
    %c0_i32_1 = arith.constant 0 : i32
    return %c0_i32, %c0_i32_0 : i32, i32
  }
  func.func @transform_6(%arg0: i32) -> (i32, i32) {
    %c0_i32 = arith.constant 0 : i32
    %c0_i32_0 = arith.constant 0 : i32
    %c0_i32_1 = arith.constant 0 : i32
    return %c0_i32, %c0_i32_0 : i32, i32
  }
  func.func @transform_7(%arg0: i32) -> (i32, i32) {
    %c0_i32 = arith.constant 0 : i32
    %c0_i32_0 = arith.constant 0 : i32
    %c0_i32_1 = arith.constant 0 : i32
    return %c0_i32, %c0_i32_0 : i32, i32
  }
  func.func @transform_8(%arg0: i32) -> (i32, i32) {
    %c0_i32 = arith.constant 0 : i32
    %c0_i32_0 = arith.constant 0 : i32
    %c0_i32_1 = arith.constant 0 : i32
    return %c0_i32, %c0_i32_0 : i32, i32
  }
  func.func @transform_9(%arg0: i32) -> (i32, i32) {
    %c0_i32 = arith.constant 0 : i32
    %c0_i32_0 = arith.constant 0 : i32
    return %arg0, %c0_i32 : i32, i32
  }
}

module attributes {stable_mosaic.version = 11 : i64} {
  func.func @_generator_kernel(%arg0: i32, %arg1: memref<128x128xbf16, #tpu.memory_space<vmem>>, %arg2: memref<128x128xbf16, #tpu.memory_space<vmem>>, %arg3: memref<1x128xbf16, #tpu.memory_space<vmem>>, %arg4: memref<128x128xbf16, #tpu.memory_space<vmem>>, %arg5: memref<1x128xbf16, #tpu.memory_space<vmem>>, %arg6: memref<128x128xbf16, #tpu.memory_space<vmem>>, %arg7: memref<1x128xbf16, #tpu.memory_space<vmem>>, %arg8: memref<128x128xbf16, #tpu.memory_space<vmem>>, %arg9: memref<1x128xbf16, #tpu.memory_space<vmem>>, %arg10: memref<128x128xbf16, #tpu.memory_space<vmem>>) attributes {dimension_semantics = [#tpu.dimension_semantics<parallel>], iteration_bounds = array<i64: 1>, scalar_prefetch = 0 : i64, scratch_operands = 0 : i64, tpu.core_type = #tpu.core_type<tc>, window_params = [{transform_indices = @transform_0, window_bounds = array<i64: 128, 128>}, {pipeline_mode = #tpu.pipeline_mode<synchronous>, transform_indices = @transform_1, window_bounds = array<i64: 128, 128>}, {pipeline_mode = #tpu.pipeline_mode<synchronous>, transform_indices = @transform_2, window_bounds = array<i64: 1, 128>}, {pipeline_mode = #tpu.pipeline_mode<synchronous>, transform_indices = @transform_3, window_bounds = array<i64: 128, 128>}, {pipeline_mode = #tpu.pipeline_mode<synchronous>, transform_indices = @transform_4, window_bounds = array<i64: 1, 128>}, {pipeline_mode = #tpu.pipeline_mode<synchronous>, transform_indices = @transform_5, window_bounds = array<i64: 128, 128>}, {pipeline_mode = #tpu.pipeline_mode<synchronous>, transform_indices = @transform_6, window_bounds = array<i64: 1, 128>}, {pipeline_mode = #tpu.pipeline_mode<synchronous>, transform_indices = @transform_7, window_bounds = array<i64: 128, 128>}, {pipeline_mode = #tpu.pipeline_mode<synchronous>, transform_indices = @transform_8, window_bounds = array<i64: 1, 128>}, {transform_indices = @transform_9, window_bounds = array<i64: 128, 128>}]} {
    %c0 = arith.constant 0 : index
    %c0_0 = arith.constant 0 : index
    %0 = vector.load %arg3[%c0, %c0_0] : memref<1x128xbf16, #tpu.memory_space<vmem>>, vector<1x128xbf16>
    %c0_1 = arith.constant 0 : index
    %c0_2 = arith.constant 0 : index
    %1 = vector.load %arg5[%c0_1, %c0_2] : memref<1x128xbf16, #tpu.memory_space<vmem>>, vector<1x128xbf16>
    %c0_3 = arith.constant 0 : index
    %c0_4 = arith.constant 0 : index
    %2 = vector.load %arg7[%c0_3, %c0_4] : memref<1x128xbf16, #tpu.memory_space<vmem>>, vector<1x128xbf16>
    %c0_5 = arith.constant 0 : index
    %c0_6 = arith.constant 0 : index
    %3 = vector.load %arg9[%c0_5, %c0_6] : memref<1x128xbf16, #tpu.memory_space<vmem>>, vector<1x128xbf16>
    %c0_7 = arith.constant 0 : index
    %c0_8 = arith.constant 0 : index
    %4 = vector.load %arg1[%c0_7, %c0_8] : memref<128x128xbf16, #tpu.memory_space<vmem>>, vector<128x128xbf16>
    %c0_9 = arith.constant 0 : index
    %c0_10 = arith.constant 0 : index
    %5 = vector.load %arg2[%c0_9, %c0_10] : memref<128x128xbf16, #tpu.memory_space<vmem>>, vector<128x128xbf16>
    %cst = arith.constant dense<0.000000e+00> : vector<128x128xf32>
    %6 = tpu.matmul %4, %5, %cst {dimension_numbers = #tpu.dot_dimension_numbers<[1], [0], [0], [1], [0, 0, 1, 1], [], []>} : vector<128x128xbf16>, vector<128x128xbf16>, vector<128x128xf32> -> vector<128x128xf32>
    %7 = arith.truncf %6 : vector<128x128xf32> to vector<128x128xbf16>
    %8 = vector.broadcast %0 : vector<1x128xbf16> to vector<128x128xbf16>
    %9 = arith.addf %7, %8 : vector<128x128xbf16>
    %cst_11 = arith.constant 0.000000e+00 : bf16
    %10 = vector.broadcast %cst_11 : bf16 to vector<128x128xbf16>
    %11 = arith.cmpf ogt, %9, %10 : vector<128x128xbf16>
    %cst_12 = arith.constant 2.001950e-01 : bf16
    %12 = vector.broadcast %cst_12 : bf16 to vector<128x128xbf16>
    %13 = arith.mulf %12, %9 : vector<128x128xbf16>
    %14 = arith.select %11, %9, %13 : vector<128x128xi1>, vector<128x128xbf16>
    %c0_13 = arith.constant 0 : index
    %c0_14 = arith.constant 0 : index
    %15 = vector.load %arg4[%c0_13, %c0_14] : memref<128x128xbf16, #tpu.memory_space<vmem>>, vector<128x128xbf16>
    %cst_15 = arith.constant dense<0.000000e+00> : vector<128x128xf32>
    %16 = tpu.matmul %14, %15, %cst_15 {dimension_numbers = #tpu.dot_dimension_numbers<[1], [0], [0], [1], [0, 0, 1, 1], [], []>} : vector<128x128xbf16>, vector<128x128xbf16>, vector<128x128xf32> -> vector<128x128xf32>
    %17 = arith.truncf %16 : vector<128x128xf32> to vector<128x128xbf16>
    %18 = vector.broadcast %1 : vector<1x128xbf16> to vector<128x128xbf16>
    %19 = arith.addf %17, %18 : vector<128x128xbf16>
    %cst_16 = arith.constant 0.000000e+00 : bf16
    %20 = vector.broadcast %cst_16 : bf16 to vector<128x128xbf16>
    %21 = arith.cmpf ogt, %19, %20 : vector<128x128xbf16>
    %cst_17 = arith.constant 2.001950e-01 : bf16
    %22 = vector.broadcast %cst_17 : bf16 to vector<128x128xbf16>
    %23 = arith.mulf %22, %19 : vector<128x128xbf16>
    %24 = arith.select %21, %19, %23 : vector<128x128xi1>, vector<128x128xbf16>
    %c0_18 = arith.constant 0 : index
    %c0_19 = arith.constant 0 : index
    %25 = vector.load %arg6[%c0_18, %c0_19] : memref<128x128xbf16, #tpu.memory_space<vmem>>, vector<128x128xbf16>
    %cst_20 = arith.constant dense<0.000000e+00> : vector<128x128xf32>
    %26 = tpu.matmul %24, %25, %cst_20 {dimension_numbers = #tpu.dot_dimension_numbers<[1], [0], [0], [1], [0, 0, 1, 1], [], []>} : vector<128x128xbf16>, vector<128x128xbf16>, vector<128x128xf32> -> vector<128x128xf32>
    %27 = arith.truncf %26 : vector<128x128xf32> to vector<128x128xbf16>
    %28 = vector.broadcast %2 : vector<1x128xbf16> to vector<128x128xbf16>
    %29 = arith.addf %27, %28 : vector<128x128xbf16>
    %cst_21 = arith.constant 0.000000e+00 : bf16
    %30 = vector.broadcast %cst_21 : bf16 to vector<128x128xbf16>
    %31 = arith.cmpf ogt, %29, %30 : vector<128x128xbf16>
    %cst_22 = arith.constant 2.001950e-01 : bf16
    %32 = vector.broadcast %cst_22 : bf16 to vector<128x128xbf16>
    %33 = arith.mulf %32, %29 : vector<128x128xbf16>
    %34 = arith.select %31, %29, %33 : vector<128x128xi1>, vector<128x128xbf16>
    %c0_23 = arith.constant 0 : index
    %c0_24 = arith.constant 0 : index
    %35 = vector.load %arg8[%c0_23, %c0_24] : memref<128x128xbf16, #tpu.memory_space<vmem>>, vector<128x128xbf16>
    %cst_25 = arith.constant dense<0.000000e+00> : vector<128x128xf32>
    %36 = tpu.matmul %34, %35, %cst_25 {dimension_numbers = #tpu.dot_dimension_numbers<[1], [0], [0], [1], [0, 0, 1, 1], [], []>} : vector<128x128xbf16>, vector<128x128xbf16>, vector<128x128xf32> -> vector<128x128xf32>
    %37 = arith.truncf %36 : vector<128x128xf32> to vector<128x128xbf16>
    %38 = vector.broadcast %3 : vector<1x128xbf16> to vector<128x128xbf16>
    %39 = arith.addf %37, %38 : vector<128x128xbf16>
    %40 = math.tanh %39 : vector<128x128xbf16>
    %c0_26 = arith.constant 0 : index
    %c0_27 = arith.constant 0 : index
    %41 = vector.load %arg10[%c0_26, %c0_27] : memref<128x128xbf16, #tpu.memory_space<vmem>>, vector<128x128xbf16>
    tpu.vector_store %arg10[%c0_26, %c0_27], %40 {strides = array<i32>} : memref<128x128xbf16, #tpu.memory_space<vmem>>, vector<128x128xbf16>,
    return
  }
  func.func @transform_0(%arg0: i32) -> (i32, i32) {
    %c0_i32 = arith.constant 0 : i32
    %c0_i32_0 = arith.constant 0 : i32
    return %arg0, %c0_i32 : i32, i32
  }
  func.func @transform_1(%arg0: i32) -> (i32, i32) {
    %c0_i32 = arith.constant 0 : i32
    %c0_i32_0 = arith.constant 0 : i32
    %c0_i32_1 = arith.constant 0 : i32
    return %c0_i32, %c0_i32_0 : i32, i32
  }
  func.func @transform_2(%arg0: i32) -> (i32, i32) {
    %c0_i32 = arith.constant 0 : i32
    %c0_i32_0 = arith.constant 0 : i32
    %c0_i32_1 = arith.constant 0 : i32
    return %c0_i32, %c0_i32_0 : i32, i32
  }
  func.func @transform_3(%arg0: i32) -> (i32, i32) {
    %c0_i32 = arith.constant 0 : i32
    %c0_i32_0 = arith.constant 0 : i32
    %c0_i32_1 = arith.constant 0 : i32
    return %c0_i32, %c0_i32_0 : i32, i32
  }
  func.func @transform_4(%arg0: i32) -> (i32, i32) {
    %c0_i32 = arith.constant 0 : i32
    %c0_i32_0 = arith.constant 0 : i32
    %c0_i32_1 = arith.constant 0 : i32
    return %c0_i32, %c0_i32_0 : i32, i32
  }
  func.func @transform_5(%arg0: i32) -> (i32, i32) {
    %c0_i32 = arith.constant 0 : i32
    %c0_i32_0 = arith.constant 0 : i32
    %c0_i32_1 = arith.constant 0 : i32
    return %c0_i32, %c0_i32_0 : i32, i32
  }
  func.func @transform_6(%arg0: i32) -> (i32, i32) {
    %c0_i32 = arith.constant 0 : i32
    %c0_i32_0 = arith.constant 0 : i32
    %c0_i32_1 = arith.constant 0 : i32
    return %c0_i32, %c0_i32_0 : i32, i32
  }
  func.func @transform_7(%arg0: i32) -> (i32, i32) {
    %c0_i32 = arith.constant 0 : i32
    %c0_i32_0 = arith.constant 0 : i32
    %c0_i32_1 = arith.constant 0 : i32
    return %c0_i32, %c0_i32_0 : i32, i32
  }
  func.func @transform_8(%arg0: i32) -> (i32, i32) {
    %c0_i32 = arith.constant 0 : i32
    %c0_i32_0 = arith.constant 0 : i32
    %c0_i32_1 = arith.constant 0 : i32
    return %c0_i32, %c0_i32_0 : i32, i32
  }
  func.func @transform_9(%arg0: i32) -> (i32, i32) {
    %c0_i32 = arith.constant 0 : i32
    %c0_i32_0 = arith.constant 0 : i32
    return %arg0, %c0_i32 : i32, i32
  }
}

</mosaic_0001>

<llo_original>
// kernel: tpu_custom_call.1
$region0: #{tpu_custom_call.1}
  #allocation0 [shape = 'u32[]', space=smem, size = 0x4, offset = 0x4, fixed_abs, tag = 'smem constant byte address 0x4 - core index']
  #allocation1 [shape = 'u32[144,128]{1,0:T(1,128)}', space=vmem, size = 0x12000, scoped, tag = 'internal scratch']
  %s0 = inlined_call_operand.hbm [shape: bf16[128,128], index: 0, kind: input, shape index: {}]
  %s1 = inlined_call_operand.hbm [shape: bf16[128,128], index: 1, kind: input, shape index: {}]
  %s2 = inlined_call_operand.vmem [shape: bf16[1,128], index: 2, kind: input, shape index: {}]
  %s3 = inlined_call_operand.hbm [shape: bf16[128,128], index: 3, kind: input, shape index: {}]
  %s4 = inlined_call_operand.vmem [shape: bf16[1,128], index: 4, kind: input, shape index: {}]
  %s5 = inlined_call_operand.hbm [shape: bf16[128,128], index: 5, kind: input, shape index: {}]
  %s6 = inlined_call_operand.vmem [shape: bf16[1,128], index: 6, kind: input, shape index: {}]
  %s7 = inlined_call_operand.hbm [shape: bf16[128,128], index: 7, kind: input, shape index: {}]
  %s8 = inlined_call_operand.vmem [shape: bf16[1,128], index: 8, kind: input, shape index: {}]
  %s9 = inlined_call_operand.hbm [shape: bf16[128,128], index: 9, kind: output, shape index: {}]
  %s10 = sld [smem:[#allocation0]]
  $region66: #{tpu_custom_call.1} parent=0
    _
  %s12 = ssub.s32 1, %s10
  %s13 = scalar_select 0, %s12, %s10
  $region1: #{tpu_custom_call.1} parent=0
    #allocation2 [shape = 'u8[32768]{0}', space=vmem, size = 0x8000, scoped, tag = 'input window, operand 0, single buffered']
    #allocation3 [shape = 's32[1]{0}', space=sflag, size = 0x4, scoped, tag = 'scoped memory for tpu_custom_call.1']
    #allocation4 [shape = 's32[1]{0}', space=sflag, size = 0x4, scoped, tag = 'scoped memory for tpu_custom_call.1']
    #allocation5 [shape = 'u8[32768]{0}', space=vmem, size = 0x8000, scoped, tag = 'input window, operand 1, single buffered']
    #allocation6 [shape = 's32[1]{0}', space=sflag, size = 0x4, scoped, tag = 'scoped memory for tpu_custom_call.1']
    #allocation7 [shape = 'u8[32768]{0}', space=vmem, size = 0x8000, scoped, tag = 'input window, operand 3, single buffered']
    #allocation8 [shape = 'u8[32768]{0}', space=vmem, size = 0x8000, scoped, tag = 'input window, operand 5, single buffered']
    #allocation9 [shape = 's32[1]{0}', space=sflag, size = 0x4, scoped, tag = 'scoped memory for tpu_custom_call.1']
    #allocation10 [shape = 'u8[32768]{0}', space=vmem, size = 0x8000, scoped, tag = 'input window, operand 7, single buffered']
    #allocation11 [shape = 'u8[32768]{0}', space=vmem, size = 0x8000, scoped, tag = 'output window, operand 0, single buffered']
    %14 = vsyncpa [#allocation3], 0
    %15 = vsyncpa [#allocation6], 0
    %16 = vsyncpa [#allocation9], 0
    %17 = vsyncpa [#allocation4], 0
    // Predicated region
    $region2: #{tpu_custom_call.1} parent=1 // pred_check
      _
    $region3: #{tpu_custom_call.1} parent=1 // pred_check_branch
      %19 = sbr.rel (0) target = $region5
    $region4: #{tpu_custom_call.1} parent=1 // pred_region
      %s21 = ssub.s32 1024, 1024
      %22 = vsyncadd [#allocation3], %s21
      %s23 = sshll.u32 [#allocation2], 4
      %s24 = int_to_ptr.vmem [resolvable:$true] %s23
      %29 = dma.hbm_to_vmem [thread:$0]  %s0, 1024, %s24, [#allocation3], 64, 64, 4
    $region5: #{tpu_custom_call.1} parent=1 // pred_fallthru
      _
    // Predicated region
    $region6: #{tpu_custom_call.1} parent=1 // pred_check
      _
    $region7: #{tpu_custom_call.1} parent=1 // pred_check_branch
      %31 = sbr.rel (0) target = $region9
    $region8: #{tpu_custom_call.1} parent=1 // pred_region
      %s33 = ssub.s32 1024, 1024
      %34 = vsyncadd [#allocation6], %s33
      %s35 = sshll.u32 [#allocation5], 4
      %s36 = int_to_ptr.vmem [resolvable:$true] %s35
      %41 = dma.hbm_to_vmem [thread:$0]  %s1, 1024, %s36, [#allocation6], 64, 64, 4
    $region9: #{tpu_custom_call.1} parent=1 // pred_fallthru
      _
    // Predicated region
    $region10: #{tpu_custom_call.1} parent=1 // pred_check
      _
    $region11: #{tpu_custom_call.1} parent=1 // pred_check_branch
      %43 = sbr.rel (0) target = $region13
    $region12: #{tpu_custom_call.1} parent=1 // pred_region
      _
    $region13: #{tpu_custom_call.1} parent=1 // pred_fallthru
      _
    // Predicated region
    $region14: #{tpu_custom_call.1} parent=1 // pred_check
      _
    $region15: #{tpu_custom_call.1} parent=1 // pred_check_branch
      %45 = sbr.rel (0) target = $region17
    $region16: #{tpu_custom_call.1} parent=1 // pred_region
      %s47 = ssub.s32 1024, 1024
      %48 = vsyncadd [#allocation6], %s47
      %s49 = sshll.u32 [#allocation7], 4
      %s50 = int_to_ptr.vmem [resolvable:$true] %s49
      %55 = dma.hbm_to_vmem [thread:$0]  %s3, 1024, %s50, [#allocation6], 64, 64, 4
    $region17: #{tpu_custom_call.1} parent=1 // pred_fallthru
      _
    // Predicated region
    $region18: #{tpu_custom_call.1} parent=1 // pred_check
      _
    $region19: #{tpu_custom_call.1} parent=1 // pred_check_branch
      %57 = sbr.rel (0) target = $region21
    $region20: #{tpu_custom_call.1} parent=1 // pred_region
      _
    $region21: #{tpu_custom_call.1} parent=1 // pred_fallthru
      _
    // Predicated region
    $region22: #{tpu_custom_call.1} parent=1 // pred_check
      _
    $region23: #{tpu_custom_call.1} parent=1 // pred_check_branch
      %59 = sbr.rel (0) target = $region25
    $region24: #{tpu_custom_call.1} parent=1 // pred_region
      %s61 = ssub.s32 1024, 1024
      %62 = vsyncadd [#allocation9], %s61
      %s63 = sshll.u32 [#allocation8], 4
      %s64 = int_to_ptr.vmem [resolvable:$true] %s63
      %69 = dma.hbm_to_vmem [thread:$0]  %s5, 1024, %s64, [#allocation9], 64, 64, 4
    $region25: #{tpu_custom_call.1} parent=1 // pred_fallthru
      _
    // Predicated region
    $region26: #{tpu_custom_call.1} parent=1 // pred_check
      _
    $region27: #{tpu_custom_call.1} parent=1 // pred_check_branch
      %71 = sbr.rel (0) target = $region29
    $region28: #{tpu_custom_call.1} parent=1 // pred_region
      _
    $region29: #{tpu_custom_call.1} parent=1 // pred_fallthru
      _
    // Predicated region
    $region30: #{tpu_custom_call.1} parent=1 // pred_check
      _
    $region31: #{tpu_custom_call.1} parent=1 // pred_check_branch
      %73 = sbr.rel (0) target = $region33
    $region32: #{tpu_custom_call.1} parent=1 // pred_region
      %s75 = ssub.s32 1024, 1024
      %76 = vsyncadd [#allocation9], %s75
      %s77 = sshll.u32 [#allocation10], 4
      %s78 = int_to_ptr.vmem [resolvable:$true] %s77
      %83 = dma.hbm_to_vmem [thread:$0]  %s7, 1024, %s78, [#allocation9], 64, 64, 4
    $region33: #{tpu_custom_call.1} parent=1 // pred_fallthru
      _
    // Predicated region
    $region34: #{tpu_custom_call.1} parent=1 // pred_check
      _
    $region35: #{tpu_custom_call.1} parent=1 // pred_check_branch
      %85 = sbr.rel (0) target = $region37
    $region36: #{tpu_custom_call.1} parent=1 // pred_region
      _
    $region37: #{tpu_custom_call.1} parent=1 // pred_fallthru
      _
    // Predicated region
    $region38: #{tpu_custom_call.1} parent=1 // pred_check
      _
    $region39: #{tpu_custom_call.1} parent=1 // pred_check_branch
      %87 = sbr.rel (0) target = $region41
    $region40: #{tpu_custom_call.1} parent=1 // pred_region
      %88 = dma.done [#allocation3], 1024
    $region41: #{tpu_custom_call.1} parent=1 // pred_fallthru
      _
    // Predicated region
    $region42: #{tpu_custom_call.1} parent=1 // pred_check
      _
    $region43: #{tpu_custom_call.1} parent=1 // pred_check_branch
      %90 = sbr.rel (0) target = $region45
    $region44: #{tpu_custom_call.1} parent=1 // pred_region
      %91 = dma.done [#allocation6], 1024
    $region45: #{tpu_custom_call.1} parent=1 // pred_fallthru
      _
    // Predicated region
    $region46: #{tpu_custom_call.1} parent=1 // pred_check
      _
    $region47: #{tpu_custom_call.1} parent=1 // pred_check_branch
      %93 = sbr.rel (0) target = $region49
    $region48: #{tpu_custom_call.1} parent=1 // pred_region
      %94 = dma.done [#allocation6], 1024
    $region49: #{tpu_custom_call.1} parent=1 // pred_fallthru
      _
    // Predicated region
    $region50: #{tpu_custom_call.1} parent=1 // pred_check
      _
    $region51: #{tpu_custom_call.1} parent=1 // pred_check_branch
      %96 = sbr.rel (0) target = $region53
    $region52: #{tpu_custom_call.1} parent=1 // pred_region
      %97 = dma.done [#allocation9], 1024
    $region53: #{tpu_custom_call.1} parent=1 // pred_fallthru
      _
    // Predicated region
    $region54: #{tpu_custom_call.1} parent=1 // pred_check
      _
    $region55: #{tpu_custom_call.1} parent=1 // pred_check_branch
      %99 = sbr.rel (0) target = $region57
    $region56: #{tpu_custom_call.1} parent=1 // pred_region
      %100 = dma.done [#allocation9], 1024
    $region57: #{tpu_custom_call.1} parent=1 // pred_fallthru
      _
    %v103 = vld [vmem:[%s2] sm:$0x1]
    %v104 = vld [vmem:[%s4] sm:$0x1]
    %v105 = vld [vmem:[%s6] sm:$0x1]
    %v106 = vld [vmem:[%s8] sm:$0x1]
    %v107 = vld [vmem:[#allocation2] sm:$0xf]
    %v108 = vld [vmem:[#allocation2 + $0x4] sm:$0xf]
    %v109 = vld [vmem:[#allocation2 + $0x8] sm:$0xf]
    %v110 = vld [vmem:[#allocation2 + $0xc] sm:$0xf]
    %v111 = vld [vmem:[#allocation2 + $0x10] sm:$0xf]
    %v112 = vld [vmem:[#allocation2 + $0x14] sm:$0xf]
    %v113 = vld [vmem:[#allocation2 + $0x18] sm:$0xf]
    %v114 = vld [vmem:[#allocation2 + $0x1c] sm:$0xf]
    %v115 = vld [vmem:[#allocation2 + $0x20] sm:$0xf]
    %v116 = vld [vmem:[#allocation2 + $0x24] sm:$0xf]
    %v117 = vld [vmem:[#allocation2 + $0x28] sm:$0xf]
    %v118 = vld [vmem:[#allocation2 + $0x2c] sm:$0xf]
    %v119 = vld [vmem:[#allocation2 + $0x30] sm:$0xf]
    %v120 = vld [vmem:[#allocation2 + $0x34] sm:$0xf]
    %v121 = vld [vmem:[#allocation2 + $0x38] sm:$0xf]
    %v122 = vld [vmem:[#allocation2 + $0x3c] sm:$0xf]
    %v123 = vld [vmem:[#allocation5] sm:$0xf]
    %v124 = vld [vmem:[#allocation5 + $0x4] sm:$0xf]
    %v125 = vld [vmem:[#allocation5 + $0x8] sm:$0xf]
    %v126 = vld [vmem:[#allocation5 + $0xc] sm:$0xf]
    %v127 = vld [vmem:[#allocation5 + $0x10] sm:$0xf]
    %v128 = vld [vmem:[#allocation5 + $0x14] sm:$0xf]
    %v129 = vld [vmem:[#allocation5 + $0x18] sm:$0xf]
    %v130 = vld [vmem:[#allocation5 + $0x1c] sm:$0xf]
    %v131 = vld [vmem:[#allocation5 + $0x20] sm:$0xf]
    %v132 = vld [vmem:[#allocation5 + $0x24] sm:$0xf]
    %v133 = vld [vmem:[#allocation5 + $0x28] sm:$0xf]
    %v134 = vld [vmem:[#allocation5 + $0x2c] sm:$0xf]
    %v135 = vld [vmem:[#allocation5 + $0x30] sm:$0xf]
    %v136 = vld [vmem:[#allocation5 + $0x34] sm:$0xf]
    %v137 = vld [vmem:[#allocation5 + $0x38] sm:$0xf]
    %v138 = vld [vmem:[#allocation5 + $0x3c] sm:$0xf]
    %v155 = vunpack.c.l.b16 %v107
    %v156 = vunpack.c.l.b16 %v108
    %v157 = vunpack.c.l.b16 %v109
    %v158 = vunpack.c.l.b16 %v110
    %v159 = vunpack.c.l.b16 %v111
    %v160 = vunpack.c.l.b16 %v112
    %v161 = vunpack.c.l.b16 %v113
    %v162 = vunpack.c.l.b16 %v114
    %v163 = vunpack.c.l.b16 %v115
    %v164 = vunpack.c.l.b16 %v116
    %v165 = vunpack.c.l.b16 %v117
    %v166 = vunpack.c.l.b16 %v118
    %v167 = vunpack.c.l.b16 %v119
    %v168 = vunpack.c.l.b16 %v120
    %v169 = vunpack.c.l.b16 %v121
    %v170 = vunpack.c.l.b16 %v122
    %v171 = vpack.c.b16 %v156, %v155
    %v172 = vpack.c.b16 %v158, %v157
    %v173 = vpack.c.b16 %v160, %v159
    %v174 = vpack.c.b16 %v162, %v161
    %v175 = vpack.c.b16 %v164, %v163
    %v176 = vpack.c.b16 %v166, %v165
    %v177 = vpack.c.b16 %v168, %v167
    %v178 = vpack.c.b16 %v170, %v169
    %v203 = vunpack.c.l.b16 %v123
    %v204 = vunpack.c.l.b16 %v124
    %v205 = vunpack.c.l.b16 %v125
    %v206 = vunpack.c.l.b16 %v126
    %v207 = vunpack.c.l.b16 %v127
    %v208 = vunpack.c.l.b16 %v128
    %v209 = vunpack.c.l.b16 %v129
    %v210 = vunpack.c.l.b16 %v130
    %v211 = vunpack.c.l.b16 %v131
    %v212 = vunpack.c.l.b16 %v132
    %v213 = vunpack.c.l.b16 %v133
    %v214 = vunpack.c.l.b16 %v134
    %v215 = vunpack.c.l.b16 %v135
    %v216 = vunpack.c.l.b16 %v136
    %v217 = vunpack.c.l.b16 %v137
    %v218 = vunpack.c.l.b16 %v138
    %v219 = vpack.c.b16 %v204, %v203
    %v220 = vpack.c.b16 %v206, %v205
    %v221 = vpack.c.b16 %v208, %v207
    %v222 = vpack.c.b16 %v210, %v209
    %v223 = vpack.c.b16 %v212, %v211
    %v224 = vpack.c.b16 %v214, %v213
    %v225 = vpack.c.b16 %v216, %v215
    %v226 = vpack.c.b16 %v218, %v217
    %235 = vmatprep.subr.bf16.mxu0 0
    %236 = vmatpush1.bf16.msra.mxu0 %v219
    %237 = vmatprep.subr.bf16.mxu0 0
    %238 = vmatpush1.bf16.msra.mxu0 %v220
    %239 = vmatprep.subr.bf16.mxu0 0
    %240 = vmatpush1.bf16.msra.mxu0 %v221
    %241 = vmatprep.subr.bf16.mxu0 0
    %242 = vmatpush1.bf16.msra.mxu0 %v222
    %243 = vmatprep.subr.bf16.mxu0 0
    %244 = vmatpush1.bf16.msra.mxu0 %v223
    %245 = vmatprep.subr.bf16.mxu0 0
    %246 = vmatpush1.bf16.msra.mxu0 %v224
    %247 = vmatprep.subr.bf16.mxu0 0
    %248 = vmatpush1.bf16.msra.mxu0 %v225
    %249 = vmatprep.subr.bf16.mxu0 0
    %250 = vmatpush1.bf16.msra.mxu0 %v226
    %251 = vmatprep.subr.bf16.mxu0 0
    %252 = vmatpush1.bf16.msra.mxu0 0
    %253 = vmatprep.subr.bf16.mxu0 0
    %254 = vmatpush1.bf16.msra.mxu0 0
    %255 = vmatprep.subr.bf16.mxu0 0
    %256 = vmatpush1.bf16.msra.mxu0 0
    %257 = vmatprep.subr.bf16.mxu0 0
    %258 = vmatpush1.bf16.msra.mxu0 0
    %259 = vmatprep.subr.bf16.mxu0 0
    %260 = vmatpush1.bf16.msra.mxu0 0
    %261 = vmatprep.subr.bf16.mxu0 0
    %262 = vmatpush1.bf16.msra.mxu0 0
    %263 = vmatprep.subr.bf16.mxu0 0
    %264 = vmatpush1.bf16.msra.mxu0 0
    %265 = vmatprep.subr.bf16.mxu0 0
    %266 = vmatpush1.bf16.msra.mxu0 0
    %267 = vmatprep.mubr.bf16.mxu0 0
    %268 = vmatmul.mubr.bf16.gmra.mrb[0].mxu0 %v171
    %v269 = vpop.f32.mrb[0].mxu0
    %v270 = vadd.f32 0.0, %v269
    %v271 = vpop.f32.mrb[0].mxu0
    %v272 = vpop.f32.mrb[0].mxu0
    %v273 = vadd.f32 0.0, %v272
    %v274 = vpop.f32.mrb[0].mxu0
    %275 = vmatprep.mubr.bf16.mxu0 0
    %276 = vmatmul.mubr.bf16.gmra.mrb[0].mxu0 %v172
    %v277 = vpop.f32.mrb[0].mxu0
    %v278 = vadd.f32 0.0, %v277
    %v279 = vpop.f32.mrb[0].mxu0
    %v280 = vpop.f32.mrb[0].mxu0
    %v281 = vadd.f32 0.0, %v280
    %v282 = vpop.f32.mrb[0].mxu0
    %283 = vmatprep.mubr.bf16.mxu0 0
    %284 = vmatmul.mubr.bf16.gmra.mrb[0].mxu0 %v173
    %v285 = vpop.f32.mrb[0].mxu0
    %v286 = vadd.f32 0.0, %v285
    %v287 = vpop.f32.mrb[0].mxu0
    %v288 = vpop.f32.mrb[0].mxu0
    %v289 = vadd.f32 0.0, %v288
    %v290 = vpop.f32.mrb[0].mxu0
    %291 = vmatprep.mubr.bf16.mxu0 0
    %292 = vmatmul.mubr.bf16.gmra.mrb[0].mxu0 %v174
    %v293 = vpop.f32.mrb[0].mxu0
    %v294 = vadd.f32 0.0, %v293
    %v295 = vpop.f32.mrb[0].mxu0
    %v296 = vpop.f32.mrb[0].mxu0
    %v297 = vadd.f32 0.0, %v296
    %v298 = vpop.f32.mrb[0].mxu0
    %299 = vmatprep.mubr.bf16.mxu0 0
    %300 = vmatmul.mubr.bf16.gmra.mrb[0].mxu0 %v175
    %v301 = vpop.f32.mrb[0].mxu0
    %v302 = vadd.f32 0.0, %v301
    %v303 = vpop.f32.mrb[0].mxu0
    %v304 = vpop.f32.mrb[0].mxu0
    %v305 = vadd.f32 0.0, %v304
    %v306 = vpop.f32.mrb[0].mxu0
    %307 = vmatprep.mubr.bf16.mxu0 0
    %308 = vmatmul.mubr.bf16.gmra.mrb[0].mxu0 %v176
    %v309 = vpop.f32.mrb[0].mxu0
    %v310 = vadd.f32 0.0, %v309
    %v311 = vpop.f32.mrb[0].mxu0
    %v312 = vpop.f32.mrb[0].mxu0
    %v313 = vadd.f32 0.0, %v312
    %v314 = vpop.f32.mrb[0].mxu0
    %315 = vmatprep.mubr.bf16.mxu0 0
    %316 = vmatmul.mubr.bf16.gmra.mrb[0].mxu0 %v177
    %v317 = vpop.f32.mrb[0].mxu0
    %v318 = vadd.f32 0.0, %v317
    %v319 = vpop.f32.mrb[0].mxu0
    %v320 = vpop.f32.mrb[0].mxu0
    %v321 = vadd.f32 0.0, %v320
    %v322 = vpop.f32.mrb[0].mxu0
    %323 = vmatprep.mubr.bf16.mxu0 0
    %324 = vmatmul.mubr.bf16.gmra.mrb[0].mxu0 %v178
    %v325 = vpop.f32.mrb[0].mxu0
    %v326 = vadd.f32 0.0, %v325
    %v327 = vpop.f32.mrb[0].mxu0
    %v328 = vpop.f32.mrb[0].mxu0
    %v329 = vadd.f32 0.0, %v328
    %v330 = vpop.f32.mrb[0].mxu0
    %331 = vdwg.mxu0
    %v332 = vpack.c.bf16 %v273, %v270
    %v333 = vpack.c.bf16 %v281, %v278
    %v334 = vpack.c.bf16 %v289, %v286
    %v335 = vpack.c.bf16 %v297, %v294
    %v336 = vpack.c.bf16 %v305, %v302
    %v337 = vpack.c.bf16 %v313, %v310
    %v338 = vpack.c.bf16 %v321, %v318
    %v339 = vpack.c.bf16 %v329, %v326
    %v341 = vpack.i.b16 %v103, %v103
    %v343 = vlaneseq
    %v344 = vshrl.u32 %v343, 7
    %v345 = vsub.s32 0, %v344
    %v346 = vrot.slane %v341, %v345
    %v347 = vadd.bf16 %v332, %v346
    %v348 = vadd.bf16 %v333, %v346
    %v349 = vadd.bf16 %v334, %v346
    %v350 = vadd.bf16 %v335, %v346
    %v351 = vadd.bf16 %v336, %v346
    %v352 = vadd.bf16 %v337, %v346
    %v353 = vadd.bf16 %v338, %v346
    %v354 = vadd.bf16 %v339, %v346
    %vm355 = vcmp.gt.bf16.partialorder %v347, 0
    %vm356 = vcmp.gt.bf16.partialorder %v348, 0
    %vm357 = vcmp.gt.bf16.partialorder %v349, 0
    %vm358 = vcmp.gt.bf16.partialorder %v350, 0
    %vm359 = vcmp.gt.bf16.partialorder %v351, 0
    %vm360 = vcmp.gt.bf16.partialorder %v352, 0
    %vm361 = vcmp.gt.bf16.partialorder %v353, 0
    %vm362 = vcmp.gt.bf16.partialorder %v354, 0
    %v363 = vmul.bf16 %v347, 1045249613
    %v364 = vmul.bf16 %v348, 1045249613
    %v365 = vmul.bf16 %v349, 1045249613
    %v366 = vmul.bf16 %v350, 1045249613
    %v367 = vmul.bf16 %v351, 1045249613
    %v368 = vmul.bf16 %v352, 1045249613
    %v369 = vmul.bf16 %v353, 1045249613
    %v370 = vmul.bf16 %v354, 1045249613
    %v371 = vsel %vm355, %v347, %v363
    %v372 = vsel %vm356, %v348, %v364
    %v373 = vsel %vm357, %v349, %v365
    %v374 = vsel %vm358, %v350, %v366
    %v375 = vsel %vm359, %v351, %v367
    %v376 = vsel %vm360, %v352, %v368
    %v377 = vsel %vm361, %v353, %v369
    %v378 = vsel %vm362, %v354, %v370
    %v379 = vld [vmem:[#allocation7] sm:$0xf]
    %v380 = vld [vmem:[#allocation7 + $0x4] sm:$0xf]
    %v381 = vld [vmem:[#allocation7 + $0x8] sm:$0xf]
    %v382 = vld [vmem:[#allocation7 + $0xc] sm:$0xf]
    %v383 = vld [vmem:[#allocation7 + $0x10] sm:$0xf]
    %v384 = vld [vmem:[#allocation7 + $0x14] sm:$0xf]
    %v385 = vld [vmem:[#allocation7 + $0x18] sm:$0xf]
    %v386 = vld [vmem:[#allocation7 + $0x1c] sm:$0xf]
    %v387 = vld [vmem:[#allocation7 + $0x20] sm:$0xf]
    %v388 = vld [vmem:[#allocation7 + $0x24] sm:$0xf]
    %v389 = vld [vmem:[#allocation7 + $0x28] sm:$0xf]
    %v390 = vld [vmem:[#allocation7 + $0x2c] sm:$0xf]
    %v391 = vld [vmem:[#allocation7 + $0x30] sm:$0xf]
    %v392 = vld [vmem:[#allocation7 + $0x34] sm:$0xf]
    %v393 = vld [vmem:[#allocation7 + $0x38] sm:$0xf]
    %v394 = vld [vmem:[#allocation7 + $0x3c] sm:$0xf]
    %v411 = vunpack.c.l.b16 %v379
    %v412 = vunpack.c.l.b16 %v380
    %v413 = vunpack.c.l.b16 %v381
    %v414 = vunpack.c.l.b16 %v382
    %v415 = vunpack.c.l.b16 %v383
    %v416 = vunpack.c.l.b16 %v384
    %v417 = vunpack.c.l.b16 %v385
    %v418 = vunpack.c.l.b16 %v386
    %v419 = vunpack.c.l.b16 %v387
    %v420 = vunpack.c.l.b16 %v388
    %v421 = vunpack.c.l.b16 %v389
    %v422 = vunpack.c.l.b16 %v390
    %v423 = vunpack.c.l.b16 %v391
    %v424 = vunpack.c.l.b16 %v392
    %v425 = vunpack.c.l.b16 %v393
    %v426 = vunpack.c.l.b16 %v394
    %v427 = vpack.c.b16 %v412, %v411
    %v428 = vpack.c.b16 %v414, %v413
    %v429 = vpack.c.b16 %v416, %v415
    %v430 = vpack.c.b16 %v418, %v417
    %v431 = vpack.c.b16 %v420, %v419
    %v432 = vpack.c.b16 %v422, %v421
    %v433 = vpack.c.b16 %v424, %v423
    %v434 = vpack.c.b16 %v426, %v425
    %443 = vmatprep.subr.bf16.mxu0 0
    %444 = vmatpush1.bf16.msra.mxu0 %v427
    %445 = vmatprep.subr.bf16.mxu0 0
    %446 = vmatpush1.bf16.msra.mxu0 %v428
    %447 = vmatprep.subr.bf16.mxu0 0
    %448 = vmatpush1.bf16.msra.mxu0 %v429
    %449 = vmatprep.subr.bf16.mxu0 0
    %450 = vmatpush1.bf16.msra.mxu0 %v430
    %451 = vmatprep.subr.bf16.mxu0 0
    %452 = vmatpush1.bf16.msra.mxu0 %v431
    %453 = vmatprep.subr.bf16.mxu0 0
    %454 = vmatpush1.bf16.msra.mxu0 %v432
    %455 = vmatprep.subr.bf16.mxu0 0
    %456 = vmatpush1.bf16.msra.mxu0 %v433
    %457 = vmatprep.subr.bf16.mxu0 0
    %458 = vmatpush1.bf16.msra.mxu0 %v434
    %459 = vmatprep.subr.bf16.mxu0 0
    %460 = vmatpush1.bf16.msra.mxu0 0
    %461 = vmatprep.subr.bf16.mxu0 0
    %462 = vmatpush1.bf16.msra.mxu0 0
    %463 = vmatprep.subr.bf16.mxu0 0
    %464 = vmatpush1.bf16.msra.mxu0 0
    %465 = vmatprep.subr.bf16.mxu0 0
    %466 = vmatpush1.bf16.msra.mxu0 0
    %467 = vmatprep.subr.bf16.mxu0 0
    %468 = vmatpush1.bf16.msra.mxu0 0
    %469 = vmatprep.subr.bf16.mxu0 0
    %470 = vmatpush1.bf16.msra.mxu0 0
    %471 = vmatprep.subr.bf16.mxu0 0
    %472 = vmatpush1.bf16.msra.mxu0 0
    %473 = vmatprep.subr.bf16.mxu0 0
    %474 = vmatpush1.bf16.msra.mxu0 0
    %475 = vmatprep.mubr.bf16.mxu0 0
    %476 = vmatmul.mubr.bf16.gmra.mrb[0].mxu0 %v371
    %v477 = vpop.f32.mrb[0].mxu0
    %v478 = vadd.f32 0.0, %v477
    %v479 = vpop.f32.mrb[0].mxu0
    %v480 = vpop.f32.mrb[0].mxu0
    %v481 = vadd.f32 0.0, %v480
    %v482 = vpop.f32.mrb[0].mxu0
    %483 = vmatprep.mubr.bf16.mxu0 0
    %484 = vmatmul.mubr.bf16.gmra.mrb[0].mxu0 %v372
    %v485 = vpop.f32.mrb[0].mxu0
    %v486 = vadd.f32 0.0, %v485
    %v487 = vpop.f32.mrb[0].mxu0
    %v488 = vpop.f32.mrb[0].mxu0
    %v489 = vadd.f32 0.0, %v488
    %v490 = vpop.f32.mrb[0].mxu0
    %491 = vmatprep.mubr.bf16.mxu0 0
    %492 = vmatmul.mubr.bf16.gmra.mrb[0].mxu0 %v373
    %v493 = vpop.f32.mrb[0].mxu0
    %v494 = vadd.f32 0.0, %v493
    %v495 = vpop.f32.mrb[0].mxu0
    %v496 = vpop.f32.mrb[0].mxu0
    %v497 = vadd.f32 0.0, %v496
    %v498 = vpop.f32.mrb[0].mxu0
    %499 = vmatprep.mubr.bf16.mxu0 0
    %500 = vmatmul.mubr.bf16.gmra.mrb[0].mxu0 %v374
    %v501 = vpop.f32.mrb[0].mxu0
    %v502 = vadd.f32 0.0, %v501
    %v503 = vpop.f32.mrb[0].mxu0
    %v504 = vpop.f32.mrb[0].mxu0
    %v505 = vadd.f32 0.0, %v504
    %v506 = vpop.f32.mrb[0].mxu0
    %507 = vmatprep.mubr.bf16.mxu0 0
    %508 = vmatmul.mubr.bf16.gmra.mrb[0].mxu0 %v375
    %v509 = vpop.f32.mrb[0].mxu0
    %v510 = vadd.f32 0.0, %v509
    %v511 = vpop.f32.mrb[0].mxu0
    %v512 = vpop.f32.mrb[0].mxu0
    %v513 = vadd.f32 0.0, %v512
    %v514 = vpop.f32.mrb[0].mxu0
    %515 = vmatprep.mubr.bf16.mxu0 0
    %516 = vmatmul.mubr.bf16.gmra.mrb[0].mxu0 %v376
    %v517 = vpop.f32.mrb[0].mxu0
    %v518 = vadd.f32 0.0, %v517
    %v519 = vpop.f32.mrb[0].mxu0
    %v520 = vpop.f32.mrb[0].mxu0
    %v521 = vadd.f32 0.0, %v520
    %v522 = vpop.f32.mrb[0].mxu0
    %523 = vmatprep.mubr.bf16.mxu0 0
    %524 = vmatmul.mubr.bf16.gmra.mrb[0].mxu0 %v377
    %v525 = vpop.f32.mrb[0].mxu0
    %v526 = vadd.f32 0.0, %v525
    %v527 = vpop.f32.mrb[0].mxu0
    %v528 = vpop.f32.mrb[0].mxu0
    %v529 = vadd.f32 0.0, %v528
    %v530 = vpop.f32.mrb[0].mxu0
    %531 = vmatprep.mubr.bf16.mxu0 0
    %532 = vmatmul.mubr.bf16.gmra.mrb[0].mxu0 %v378
    %v533 = vpop.f32.mrb[0].mxu0
    %v534 = vadd.f32 0.0, %v533
    %v535 = vpop.f32.mrb[0].mxu0
    %v536 = vpop.f32.mrb[0].mxu0
    %v537 = vadd.f32 0.0, %v536
    %v538 = vpop.f32.mrb[0].mxu0
    %539 = vdwg.mxu0
    %v540 = vpack.c.bf16 %v481, %v478
    %v541 = vpack.c.bf16 %v489, %v486
    %v542 = vpack.c.bf16 %v497, %v494
    %v543 = vpack.c.bf16 %v505, %v502
    %v544 = vpack.c.bf16 %v513, %v510
    %v545 = vpack.c.bf16 %v521, %v518
    %v546 = vpack.c.bf16 %v529, %v526
    %v547 = vpack.c.bf16 %v537, %v534
    %v549 = vpack.i.b16 %v104, %v104
    %v551 = vlaneseq
    %v552 = vshrl.u32 %v551, 7
    %v553 = vsub.s32 0, %v552
    %v554 = vrot.slane %v549, %v553
    %v555 = vadd.bf16 %v540, %v554
    %v556 = vadd.bf16 %v541, %v554
    %v557 = vadd.bf16 %v542, %v554
    %v558 = vadd.bf16 %v543, %v554
    %v559 = vadd.bf16 %v544, %v554
    %v560 = vadd.bf16 %v545, %v554
    %v561 = vadd.bf16 %v546, %v554
    %v562 = vadd.bf16 %v547, %v554
    %vm563 = vcmp.gt.bf16.partialorder %v555, 0
    %vm564 = vcmp.gt.bf16.partialorder %v556, 0
    %vm565 = vcmp.gt.bf16.partialorder %v557, 0
    %vm566 = vcmp.gt.bf16.partialorder %v558, 0
    %vm567 = vcmp.gt.bf16.partialorder %v559, 0
    %vm568 = vcmp.gt.bf16.partialorder %v560, 0
    %vm569 = vcmp.gt.bf16.partialorder %v561, 0
    %vm570 = vcmp.gt.bf16.partialorder %v562, 0
    %v571 = vmul.bf16 %v555, 1045249613
    %v572 = vmul.bf16 %v556, 1045249613
    %v573 = vmul.bf16 %v557, 1045249613
    %v574 = vmul.bf16 %v558, 1045249613
    %v575 = vmul.bf16 %v559, 1045249613
    %v576 = vmul.bf16 %v560, 1045249613
    %v577 = vmul.bf16 %v561, 1045249613
    %v578 = vmul.bf16 %v562, 1045249613
    %v579 = vsel %vm563, %v555, %v571
    %v580 = vsel %vm564, %v556, %v572
    %v581 = vsel %vm565, %v557, %v573
    %v582 = vsel %vm566, %v558, %v574
    %v583 = vsel %vm567, %v559, %v575
    %v584 = vsel %vm568, %v560, %v576
    %v585 = vsel %vm569, %v561, %v577
    %v586 = vsel %vm570, %v562, %v578
    %v587 = vld [vmem:[#allocation8] sm:$0xf]
    %v588 = vld [vmem:[#allocation8 + $0x4] sm:$0xf]
    %v589 = vld [vmem:[#allocation8 + $0x8] sm:$0xf]
    %v590 = vld [vmem:[#allocation8 + $0xc] sm:$0xf]
    %v591 = vld [vmem:[#allocation8 + $0x10] sm:$0xf]
    %v592 = vld [vmem:[#allocation8 + $0x14] sm:$0xf]
    %v593 = vld [vmem:[#allocation8 + $0x18] sm:$0xf]
    %v594 = vld [vmem:[#allocation8 + $0x1c] sm:$0xf]
    %v595 = vld [vmem:[#allocation8 + $0x20] sm:$0xf]
    %v596 = vld [vmem:[#allocation8 + $0x24] sm:$0xf]
    %v597 = vld [vmem:[#allocation8 + $0x28] sm:$0xf]
    %v598 = vld [vmem:[#allocation8 + $0x2c] sm:$0xf]
    %v599 = vld [vmem:[#allocation8 + $0x30] sm:$0xf]
    %v600 = vld [vmem:[#allocation8 + $0x34] sm:$0xf]
    %v601 = vld [vmem:[#allocation8 + $0x38] sm:$0xf]
    %v602 = vld [vmem:[#allocation8 + $0x3c] sm:$0xf]
    %v619 = vunpack.c.l.b16 %v587
    %v620 = vunpack.c.l.b16 %v588
    %v621 = vunpack.c.l.b16 %v589
    %v622 = vunpack.c.l.b16 %v590
    %v623 = vunpack.c.l.b16 %v591
    %v624 = vunpack.c.l.b16 %v592
    %v625 = vunpack.c.l.b16 %v593
    %v626 = vunpack.c.l.b16 %v594
    %v627 = vunpack.c.l.b16 %v595
    %v628 = vunpack.c.l.b16 %v596
    %v629 = vunpack.c.l.b16 %v597
    %v630 = vunpack.c.l.b16 %v598
    %v631 = vunpack.c.l.b16 %v599
    %v632 = vunpack.c.l.b16 %v600
    %v633 = vunpack.c.l.b16 %v601
    %v634 = vunpack.c.l.b16 %v602
    %v635 = vpack.c.b16 %v620, %v619
    %v636 = vpack.c.b16 %v622, %v621
    %v637 = vpack.c.b16 %v624, %v623
    %v638 = vpack.c.b16 %v626, %v625
    %v639 = vpack.c.b16 %v628, %v627
    %v640 = vpack.c.b16 %v630, %v629
    %v641 = vpack.c.b16 %v632, %v631
    %v642 = vpack.c.b16 %v634, %v633
    %651 = vmatprep.subr.bf16.mxu0 0
    %652 = vmatpush1.bf16.msra.mxu0 %v635
    %653 = vmatprep.subr.bf16.mxu0 0
    %654 = vmatpush1.bf16.msra.mxu0 %v636
    %655 = vmatprep.subr.bf16.mxu0 0
    %656 = vmatpush1.bf16.msra.mxu0 %v637
    %657 = vmatprep.subr.bf16.mxu0 0
    %658 = vmatpush1.bf16.msra.mxu0 %v638
    %659 = vmatprep.subr.bf16.mxu0 0
    %660 = vmatpush1.bf16.msra.mxu0 %v639
    %661 = vmatprep.subr.bf16.mxu0 0
    %662 = vmatpush1.bf16.msra.mxu0 %v640
    %663 = vmatprep.subr.bf16.mxu0 0
    %664 = vmatpush1.bf16.msra.mxu0 %v641
    %665 = vmatprep.subr.bf16.mxu0 0
    %666 = vmatpush1.bf16.msra.mxu0 %v642
    %667 = vmatprep.subr.bf16.mxu0 0
    %668 = vmatpush1.bf16.msra.mxu0 0
    %669 = vmatprep.subr.bf16.mxu0 0
    %670 = vmatpush1.bf16.msra.mxu0 0
    %671 = vmatprep.subr.bf16.mxu0 0
    %672 = vmatpush1.bf16.msra.mxu0 0
    %673 = vmatprep.subr.bf16.mxu0 0
    %674 = vmatpush1.bf16.msra.mxu0 0
    %675 = vmatprep.subr.bf16.mxu0 0
    %676 = vmatpush1.bf16.msra.mxu0 0
    %677 = vmatprep.subr.bf16.mxu0 0
    %678 = vmatpush1.bf16.msra.mxu0 0
    %679 = vmatprep.subr.bf16.mxu0 0
    %680 = vmatpush1.bf16.msra.mxu0 0
    %681 = vmatprep.subr.bf16.mxu0 0
    %682 = vmatpush1.bf16.msra.mxu0 0
    %683 = vmatprep.mubr.bf16.mxu0 0
    %684 = vmatmul.mubr.bf16.gmra.mrb[0].mxu0 %v579
    %v685 = vpop.f32.mrb[0].mxu0
    %v686 = vadd.f32 0.0, %v685
    %v687 = vpop.f32.mrb[0].mxu0
    %v688 = vpop.f32.mrb[0].mxu0
    %v689 = vadd.f32 0.0, %v688
    %v690 = vpop.f32.mrb[0].mxu0
    %691 = vmatprep.mubr.bf16.mxu0 0
    %692 = vmatmul.mubr.bf16.gmra.mrb[0].mxu0 %v580
    %v693 = vpop.f32.mrb[0].mxu0
    %v694 = vadd.f32 0.0, %v693
    %v695 = vpop.f32.mrb[0].mxu0
    %v696 = vpop.f32.mrb[0].mxu0
    %v697 = vadd.f32 0.0, %v696
    %v698 = vpop.f32.mrb[0].mxu0
    %699 = vmatprep.mubr.bf16.mxu0 0
    %700 = vmatmul.mubr.bf16.gmra.mrb[0].mxu0 %v581
    %v701 = vpop.f32.mrb[0].mxu0
    %v702 = vadd.f32 0.0, %v701
    %v703 = vpop.f32.mrb[0].mxu0
    %v704 = vpop.f32.mrb[0].mxu0
    %v705 = vadd.f32 0.0, %v704
    %v706 = vpop.f32.mrb[0].mxu0
    %707 = vmatprep.mubr.bf16.mxu0 0
    %708 = vmatmul.mubr.bf16.gmra.mrb[0].mxu0 %v582
    %v709 = vpop.f32.mrb[0].mxu0
    %v710 = vadd.f32 0.0, %v709
    %v711 = vpop.f32.mrb[0].mxu0
    %v712 = vpop.f32.mrb[0].mxu0
    %v713 = vadd.f32 0.0, %v712
    %v714 = vpop.f32.mrb[0].mxu0
    %715 = vmatprep.mubr.bf16.mxu0 0
    %716 = vmatmul.mubr.bf16.gmra.mrb[0].mxu0 %v583
    %v717 = vpop.f32.mrb[0].mxu0
    %v718 = vadd.f32 0.0, %v717
    %v719 = vpop.f32.mrb[0].mxu0
    %v720 = vpop.f32.mrb[0].mxu0
    %v721 = vadd.f32 0.0, %v720
    %v722 = vpop.f32.mrb[0].mxu0
    %723 = vmatprep.mubr.bf16.mxu0 0
    %724 = vmatmul.mubr.bf16.gmra.mrb[0].mxu0 %v584
    %v725 = vpop.f32.mrb[0].mxu0
    %v726 = vadd.f32 0.0, %v725
    %v727 = vpop.f32.mrb[0].mxu0
    %v728 = vpop.f32.mrb[0].mxu0
    %v729 = vadd.f32 0.0, %v728
    %v730 = vpop.f32.mrb[0].mxu0
    %731 = vmatprep.mubr.bf16.mxu0 0
    %732 = vmatmul.mubr.bf16.gmra.mrb[0].mxu0 %v585
    %v733 = vpop.f32.mrb[0].mxu0
    %v734 = vadd.f32 0.0, %v733
    %v735 = vpop.f32.mrb[0].mxu0
    %v736 = vpop.f32.mrb[0].mxu0
    %v737 = vadd.f32 0.0, %v736
    %v738 = vpop.f32.mrb[0].mxu0
    %739 = vmatprep.mubr.bf16.mxu0 0
    %740 = vmatmul.mubr.bf16.gmra.mrb[0].mxu0 %v586
    %v741 = vpop.f32.mrb[0].mxu0
    %v742 = vadd.f32 0.0, %v741
    %v743 = vpop.f32.mrb[0].mxu0
    %v744 = vpop.f32.mrb[0].mxu0
    %v745 = vadd.f32 0.0, %v744
    %v746 = vpop.f32.mrb[0].mxu0
    %747 = vdwg.mxu0
    %v748 = vpack.c.bf16 %v689, %v686
    %v749 = vpack.c.bf16 %v697, %v694
    %v750 = vpack.c.bf16 %v705, %v702
    %v751 = vpack.c.bf16 %v713, %v710
    %v752 = vpack.c.bf16 %v721, %v718
    %v753 = vpack.c.bf16 %v729, %v726
    %v754 = vpack.c.bf16 %v737, %v734
    %v755 = vpack.c.bf16 %v745, %v742
    %v757 = vpack.i.b16 %v105, %v105
    %v759 = vlaneseq
    %v760 = vshrl.u32 %v759, 7
    %v761 = vsub.s32 0, %v760
    %v762 = vrot.slane %v757, %v761
    %v763 = vadd.bf16 %v748, %v762
    %v764 = vadd.bf16 %v749, %v762
    %v765 = vadd.bf16 %v750, %v762
    %v766 = vadd.bf16 %v751, %v762
    %v767 = vadd.bf16 %v752, %v762
    %v768 = vadd.bf16 %v753, %v762
    %v769 = vadd.bf16 %v754, %v762
    %v770 = vadd.bf16 %v755, %v762
    %vm771 = vcmp.gt.bf16.partialorder %v763, 0
    %vm772 = vcmp.gt.bf16.partialorder %v764, 0
    %vm773 = vcmp.gt.bf16.partialorder %v765, 0
    %vm774 = vcmp.gt.bf16.partialorder %v766, 0
    %vm775 = vcmp.gt.bf16.partialorder %v767, 0
    %vm776 = vcmp.gt.bf16.partialorder %v768, 0
    %vm777 = vcmp.gt.bf16.partialorder %v769, 0
    %vm778 = vcmp.gt.bf16.partialorder %v770, 0
    %v779 = vmul.bf16 %v763, 1045249613
    %v780 = vmul.bf16 %v764, 1045249613
    %v781 = vmul.bf16 %v765, 1045249613
    %v782 = vmul.bf16 %v766, 1045249613
    %v783 = vmul.bf16 %v767, 1045249613
    %v784 = vmul.bf16 %v768, 1045249613
    %v785 = vmul.bf16 %v769, 1045249613
    %v786 = vmul.bf16 %v770, 1045249613
    %v787 = vsel %vm771, %v763, %v779
    %v788 = vsel %vm772, %v764, %v780
    %v789 = vsel %vm773, %v765, %v781
    %v790 = vsel %vm774, %v766, %v782
    %v791 = vsel %vm775, %v767, %v783
    %v792 = vsel %vm776, %v768, %v784
    %v793 = vsel %vm777, %v769, %v785
    %v794 = vsel %vm778, %v770, %v786
    %v795 = vld [vmem:[#allocation10] sm:$0xf]
    %v796 = vld [vmem:[#allocation10 + $0x4] sm:$0xf]
    %v797 = vld [vmem:[#allocation10 + $0x8] sm:$0xf]
    %v798 = vld [vmem:[#allocation10 + $0xc] sm:$0xf]
    %v799 = vld [vmem:[#allocation10 + $0x10] sm:$0xf]
    %v800 = vld [vmem:[#allocation10 + $0x14] sm:$0xf]
    %v801 = vld [vmem:[#allocation10 + $0x18] sm:$0xf]
    %v802 = vld [vmem:[#allocation10 + $0x1c] sm:$0xf]
    %v803 = vld [vmem:[#allocation10 + $0x20] sm:$0xf]
    %v804 = vld [vmem:[#allocation10 + $0x24] sm:$0xf]
    %v805 = vld [vmem:[#allocation10 + $0x28] sm:$0xf]
    %v806 = vld [vmem:[#allocation10 + $0x2c] sm:$0xf]
    %v807 = vld [vmem:[#allocation10 + $0x30] sm:$0xf]
    %v808 = vld [vmem:[#allocation10 + $0x34] sm:$0xf]
    %v809 = vld [vmem:[#allocation10 + $0x38] sm:$0xf]
    %v810 = vld [vmem:[#allocation10 + $0x3c] sm:$0xf]
    %v827 = vunpack.c.l.b16 %v795
    %v828 = vunpack.c.l.b16 %v796
    %v829 = vunpack.c.l.b16 %v797
    %v830 = vunpack.c.l.b16 %v798
    %v831 = vunpack.c.l.b16 %v799
    %v832 = vunpack.c.l.b16 %v800
    %v833 = vunpack.c.l.b16 %v801
    %v834 = vunpack.c.l.b16 %v802
    %v835 = vunpack.c.l.b16 %v803
    %v836 = vunpack.c.l.b16 %v804
    %v837 = vunpack.c.l.b16 %v805
    %v838 = vunpack.c.l.b16 %v806
    %v839 = vunpack.c.l.b16 %v807
    %v840 = vunpack.c.l.b16 %v808
    %v841 = vunpack.c.l.b16 %v809
    %v842 = vunpack.c.l.b16 %v810
    %v843 = vpack.c.b16 %v828, %v827
    %v844 = vpack.c.b16 %v830, %v829
    %v845 = vpack.c.b16 %v832, %v831
    %v846 = vpack.c.b16 %v834, %v833
    %v847 = vpack.c.b16 %v836, %v835
    %v848 = vpack.c.b16 %v838, %v837
    %v849 = vpack.c.b16 %v840, %v839
    %v850 = vpack.c.b16 %v842, %v841
    %859 = vmatprep.subr.bf16.mxu0 0
    %860 = vmatpush1.bf16.msra.mxu0 %v843
    %861 = vmatprep.subr.bf16.mxu0 0
    %862 = vmatpush1.bf16.msra.mxu0 %v844
    %863 = vmatprep.subr.bf16.mxu0 0
    %864 = vmatpush1.bf16.msra.mxu0 %v845
    %865 = vmatprep.subr.bf16.mxu0 0
    %866 = vmatpush1.bf16.msra.mxu0 %v846
    %867 = vmatprep.subr.bf16.mxu0 0
    %868 = vmatpush1.bf16.msra.mxu0 %v847
    %869 = vmatprep.subr.bf16.mxu0 0
    %870 = vmatpush1.bf16.msra.mxu0 %v848
    %871 = vmatprep.subr.bf16.mxu0 0
    %872 = vmatpush1.bf16.msra.mxu0 %v849
    %873 = vmatprep.subr.bf16.mxu0 0
    %874 = vmatpush1.bf16.msra.mxu0 %v850
    %875 = vmatprep.subr.bf16.mxu0 0
    %876 = vmatpush1.bf16.msra.mxu0 0
    %877 = vmatprep.subr.bf16.mxu0 0
    %878 = vmatpush1.bf16.msra.mxu0 0
    %879 = vmatprep.subr.bf16.mxu0 0
    %880 = vmatpush1.bf16.msra.mxu0 0
    %881 = vmatprep.subr.bf16.mxu0 0
    %882 = vmatpush1.bf16.msra.mxu0 0
    %883 = vmatprep.subr.bf16.mxu0 0
    %884 = vmatpush1.bf16.msra.mxu0 0
    %885 = vmatprep.subr.bf16.mxu0 0
    %886 = vmatpush1.bf16.msra.mxu0 0
    %887 = vmatprep.subr.bf16.mxu0 0
    %888 = vmatpush1.bf16.msra.mxu0 0
    %889 = vmatprep.subr.bf16.mxu0 0
    %890 = vmatpush1.bf16.msra.mxu0 0
    %891 = vmatprep.mubr.bf16.mxu0 0
    %892 = vmatmul.mubr.bf16.gmra.mrb[0].mxu0 %v787
    %v893 = vpop.f32.mrb[0].mxu0
    %v894 = vadd.f32 0.0, %v893
    %v895 = vpop.f32.mrb[0].mxu0
    %v896 = vpop.f32.mrb[0].mxu0
    %v897 = vadd.f32 0.0, %v896
    %v898 = vpop.f32.mrb[0].mxu0
    %899 = vmatprep.mubr.bf16.mxu0 0
    %900 = vmatmul.mubr.bf16.gmra.mrb[0].mxu0 %v788
    %v901 = vpop.f32.mrb[0].mxu0
    %v902 = vadd.f32 0.0, %v901
    %v903 = vpop.f32.mrb[0].mxu0
    %v904 = vpop.f32.mrb[0].mxu0
    %v905 = vadd.f32 0.0, %v904
    %v906 = vpop.f32.mrb[0].mxu0
    %907 = vmatprep.mubr.bf16.mxu0 0
    %908 = vmatmul.mubr.bf16.gmra.mrb[0].mxu0 %v789
    %v909 = vpop.f32.mrb[0].mxu0
    %v910 = vadd.f32 0.0, %v909
    %v911 = vpop.f32.mrb[0].mxu0
    %v912 = vpop.f32.mrb[0].mxu0
    %v913 = vadd.f32 0.0, %v912
    %v914 = vpop.f32.mrb[0].mxu0
    %915 = vmatprep.mubr.bf16.mxu0 0
    %916 = vmatmul.mubr.bf16.gmra.mrb[0].mxu0 %v790
    %v917 = vpop.f32.mrb[0].mxu0
    %v918 = vadd.f32 0.0, %v917
    %v919 = vpop.f32.mrb[0].mxu0
    %v920 = vpop.f32.mrb[0].mxu0
    %v921 = vadd.f32 0.0, %v920
    %v922 = vpop.f32.mrb[0].mxu0
    %923 = vmatprep.mubr.bf16.mxu0 0
    %924 = vmatmul.mubr.bf16.gmra.mrb[0].mxu0 %v791
    %v925 = vpop.f32.mrb[0].mxu0
    %v926 = vadd.f32 0.0, %v925
    %v927 = vpop.f32.mrb[0].mxu0
    %v928 = vpop.f32.mrb[0].mxu0
    %v929 = vadd.f32 0.0, %v928
    %v930 = vpop.f32.mrb[0].mxu0
    %931 = vmatprep.mubr.bf16.mxu0 0
    %932 = vmatmul.mubr.bf16.gmra.mrb[0].mxu0 %v792
    %v933 = vpop.f32.mrb[0].mxu0
    %v934 = vadd.f32 0.0, %v933
    %v935 = vpop.f32.mrb[0].mxu0
    %v936 = vpop.f32.mrb[0].mxu0
    %v937 = vadd.f32 0.0, %v936
    %v938 = vpop.f32.mrb[0].mxu0
    %939 = vmatprep.mubr.bf16.mxu0 0
    %940 = vmatmul.mubr.bf16.gmra.mrb[0].mxu0 %v793
    %v941 = vpop.f32.mrb[0].mxu0
    %v942 = vadd.f32 0.0, %v941
    %v943 = vpop.f32.mrb[0].mxu0
    %v944 = vpop.f32.mrb[0].mxu0
    %v945 = vadd.f32 0.0, %v944
    %v946 = vpop.f32.mrb[0].mxu0
    %947 = vmatprep.mubr.bf16.mxu0 0
    %948 = vmatmul.mubr.bf16.gmra.mrb[0].mxu0 %v794
    %v949 = vpop.f32.mrb[0].mxu0
    %v950 = vadd.f32 0.0, %v949
    %v951 = vpop.f32.mrb[0].mxu0
    %v952 = vpop.f32.mrb[0].mxu0
    %v953 = vadd.f32 0.0, %v952
    %v954 = vpop.f32.mrb[0].mxu0
    %955 = vdwg.mxu0
    %v956 = vpack.c.bf16 %v897, %v894
    %v957 = vpack.c.bf16 %v905, %v902
    %v958 = vpack.c.bf16 %v913, %v910
    %v959 = vpack.c.bf16 %v921, %v918
    %v960 = vpack.c.bf16 %v929, %v926
    %v961 = vpack.c.bf16 %v937, %v934
    %v962 = vpack.c.bf16 %v945, %v942
    %v963 = vpack.c.bf16 %v953, %v950
    %v965 = vpack.i.b16 %v106, %v106
    %v967 = vlaneseq
    %v968 = vshrl.u32 %v967, 7
    %v969 = vsub.s32 0, %v968
    %v970 = vrot.slane %v965, %v969
    %v971 = vadd.bf16 %v956, %v970
    %v972 = vadd.bf16 %v957, %v970
    %v973 = vadd.bf16 %v958, %v970
    %v974 = vadd.bf16 %v959, %v970
    %v975 = vadd.bf16 %v960, %v970
    %v976 = vadd.bf16 %v961, %v970
    %v977 = vadd.bf16 %v962, %v970
    %v978 = vadd.bf16 %v963, %v970
    %v979 = vtanh.bf16.pop %v971
    %v980 = vtanh.bf16.pop %v972
    %v981 = vtanh.bf16.pop %v973
    %v982 = vtanh.bf16.pop %v974
    %v983 = vtanh.bf16.pop %v975
    %v984 = vtanh.bf16.pop %v976
    %v985 = vtanh.bf16.pop %v977
    %v986 = vtanh.bf16.pop %v978
    %v995 = vunpack.c.l.b16 %v979
    %v996 = vunpack.c.h.b16 %v979
    %v997 = vunpack.c.l.b16 %v980
    %v998 = vunpack.c.h.b16 %v980
    %v999 = vunpack.c.l.b16 %v981
    %v1000 = vunpack.c.h.b16 %v981
    %v1001 = vunpack.c.l.b16 %v982
    %v1002 = vunpack.c.h.b16 %v982
    %v1003 = vunpack.c.l.b16 %v983
    %v1004 = vunpack.c.h.b16 %v983
    %v1005 = vunpack.c.l.b16 %v984
    %v1006 = vunpack.c.h.b16 %v984
    %v1007 = vunpack.c.l.b16 %v985
    %v1008 = vunpack.c.h.b16 %v985
    %v1009 = vunpack.c.l.b16 %v986
    %v1010 = vunpack.c.h.b16 %v986
    %v1011 = vpack.c.b16 %v995, %v995
    %v1012 = vpack.c.b16 %v996, %v996
    %v1013 = vpack.c.b16 %v997, %v997
    %v1014 = vpack.c.b16 %v998, %v998
    %v1015 = vpack.c.b16 %v999, %v999
    %v1016 = vpack.c.b16 %v1000, %v1000
    %v1017 = vpack.c.b16 %v1001, %v1001
    %v1018 = vpack.c.b16 %v1002, %v1002
    %v1019 = vpack.c.b16 %v1003, %v1003
    %v1020 = vpack.c.b16 %v1004, %v1004
    %v1021 = vpack.c.b16 %v1005, %v1005
    %v1022 = vpack.c.b16 %v1006, %v1006
    %v1023 = vpack.c.b16 %v1007, %v1007
    %v1024 = vpack.c.b16 %v1008, %v1008
    %v1025 = vpack.c.b16 %v1009, %v1009
    %v1026 = vpack.c.b16 %v1010, %v1010
    %1043 = vst [vmem:[#allocation11] sm:$0xf] %v1011
    %1044 = vst [vmem:[#allocation11 + $0x4] sm:$0xf] %v1012
    %1045 = vst [vmem:[#allocation11 + $0x8] sm:$0xf] %v1013
    %1046 = vst [vmem:[#allocation11 + $0xc] sm:$0xf] %v1014
    %1047 = vst [vmem:[#allocation11 + $0x10] sm:$0xf] %v1015
    %1048 = vst [vmem:[#allocation11 + $0x14] sm:$0xf] %v1016
    %1049 = vst [vmem:[#allocation11 + $0x18] sm:$0xf] %v1017
    %1050 = vst [vmem:[#allocation11 + $0x1c] sm:$0xf] %v1018
    %1051 = vst [vmem:[#allocation11 + $0x20] sm:$0xf] %v1019
    %1052 = vst [vmem:[#allocation11 + $0x24] sm:$0xf] %v1020
    %1053 = vst [vmem:[#allocation11 + $0x28] sm:$0xf] %v1021
    %1054 = vst [vmem:[#allocation11 + $0x2c] sm:$0xf] %v1022
    %1055 = vst [vmem:[#allocation11 + $0x30] sm:$0xf] %v1023
    %1056 = vst [vmem:[#allocation11 + $0x34] sm:$0xf] %v1024
    %1057 = vst [vmem:[#allocation11 + $0x38] sm:$0xf] %v1025
    %1058 = vst [vmem:[#allocation11 + $0x3c] sm:$0xf] %v1026
    // Predicated region
    $region58: #{tpu_custom_call.1} parent=1 // pred_check
      _
    $region59: #{tpu_custom_call.1} parent=1 // pred_check_branch
      %1060 = sbr.rel (0) target = $region61
    $region60: #{tpu_custom_call.1} parent=1 // pred_region
      %s1062 = ssub.s32 1024, 1024
      %1063 = vsyncadd [#allocation4], %s1062
      %s1064 = sshll.u32 [#allocation11], 4
      %s1065 = int_to_ptr.vmem [resolvable:$true] %s1064
      %1070 = dma.vmem_to_hbm [thread:$0]  %s1065, 1024, %s9, [#allocation4], 64, 64, 4
    $region61: #{tpu_custom_call.1} parent=1 // pred_fallthru
      _
    // Predicated region
    $region62: #{tpu_custom_call.1} parent=1 // pred_check
      _
    $region63: #{tpu_custom_call.1} parent=1 // pred_check_branch
      %1072 = sbr.rel (0) target = $region65
    $region64: #{tpu_custom_call.1} parent=1 // pred_region
      %1073 = dma.done [#allocation4], 1024
    $region65: #{tpu_custom_call.1} parent=1 // pred_fallthru
      _
    %1074 = vsyncpa [#allocation3], 1
    %1075 = vsyncpa [#allocation6], 1
    %1076 = vsyncpa [#allocation9], 1
    %1077 = vsyncpa [#allocation4], 1

// kernel: tpu_custom_call.1
$region0: #{tpu_custom_call.1}
  #allocation0 [shape = 'u32[]', space=smem, size = 0x4, offset = 0x4, fixed_abs, tag = 'smem constant byte address 0x4 - core index']
  #allocation1 [shape = 'u32[144,128]{1,0:T(1,128)}', space=vmem, size = 0x12000, scoped, tag = 'internal scratch']
  %s0 = inlined_call_operand.hbm [shape: bf16[128,128], index: 0, kind: input, shape index: {}]
  %s1 = inlined_call_operand.hbm [shape: bf16[128,128], index: 1, kind: input, shape index: {}]
  %s2 = inlined_call_operand.vmem [shape: bf16[1,128], index: 2, kind: input, shape index: {}]
  %s3 = inlined_call_operand.hbm [shape: bf16[128,128], index: 3, kind: input, shape index: {}]
  %s4 = inlined_call_operand.vmem [shape: bf16[1,128], index: 4, kind: input, shape index: {}]
  %s5 = inlined_call_operand.hbm [shape: bf16[128,128], index: 5, kind: input, shape index: {}]
  %s6 = inlined_call_operand.vmem [shape: bf16[1,128], index: 6, kind: input, shape index: {}]
  %s7 = inlined_call_operand.hbm [shape: bf16[128,128], index: 7, kind: input, shape index: {}]
  %s8 = inlined_call_operand.vmem [shape: bf16[1,128], index: 8, kind: input, shape index: {}]
  %s9 = inlined_call_operand.hbm [shape: bf16[128,128], index: 9, kind: output, shape index: {}]
  %s10 = sld [smem:[#allocation0]]
  $region66: #{tpu_custom_call.1} parent=0
    _
  %s12 = ssub.s32 1, %s10
  %s13 = scalar_select 0, %s12, %s10
  $region1: #{tpu_custom_call.1} parent=0
    #allocation2 [shape = 'u8[32768]{0}', space=vmem, size = 0x8000, scoped, tag = 'input window, operand 0, single buffered']
    #allocation3 [shape = 's32[1]{0}', space=sflag, size = 0x4, scoped, tag = 'scoped memory for tpu_custom_call.1']
    #allocation4 [shape = 's32[1]{0}', space=sflag, size = 0x4, scoped, tag = 'scoped memory for tpu_custom_call.1']
    #allocation5 [shape = 'u8[32768]{0}', space=vmem, size = 0x8000, scoped, tag = 'input window, operand 1, single buffered']
    #allocation6 [shape = 's32[1]{0}', space=sflag, size = 0x4, scoped, tag = 'scoped memory for tpu_custom_call.1']
    #allocation7 [shape = 'u8[32768]{0}', space=vmem, size = 0x8000, scoped, tag = 'input window, operand 3, single buffered']
    #allocation8 [shape = 'u8[32768]{0}', space=vmem, size = 0x8000, scoped, tag = 'input window, operand 5, single buffered']
    #allocation9 [shape = 's32[1]{0}', space=sflag, size = 0x4, scoped, tag = 'scoped memory for tpu_custom_call.1']
    #allocation10 [shape = 'u8[32768]{0}', space=vmem, size = 0x8000, scoped, tag = 'input window, operand 7, single buffered']
    #allocation11 [shape = 'u8[32768]{0}', space=vmem, size = 0x8000, scoped, tag = 'output window, operand 0, single buffered']
    %14 = vsyncpa [#allocation3], 0
    %15 = vsyncpa [#allocation6], 0
    %16 = vsyncpa [#allocation9], 0
    %17 = vsyncpa [#allocation4], 0
    // Predicated region
    $region2: #{tpu_custom_call.1} parent=1 // pred_check
      _
    $region3: #{tpu_custom_call.1} parent=1 // pred_check_branch
      %19 = sbr.rel (0) target = $region5
    $region4: #{tpu_custom_call.1} parent=1 // pred_region
      %s21 = ssub.s32 1024, 1024
      %22 = vsyncadd [#allocation3], %s21
      %s23 = sshll.u32 [#allocation2], 4
      %s24 = int_to_ptr.vmem [resolvable:$true] %s23
      %29 = dma.hbm_to_vmem [thread:$0]  %s0, 1024, %s24, [#allocation3], 64, 64, 4
    $region5: #{tpu_custom_call.1} parent=1 // pred_fallthru
      _
    // Predicated region
    $region6: #{tpu_custom_call.1} parent=1 // pred_check
      _
    $region7: #{tpu_custom_call.1} parent=1 // pred_check_branch
      %31 = sbr.rel (0) target = $region9
    $region8: #{tpu_custom_call.1} parent=1 // pred_region
      %s33 = ssub.s32 1024, 1024
      %34 = vsyncadd [#allocation6], %s33
      %s35 = sshll.u32 [#allocation5], 4
      %s36 = int_to_ptr.vmem [resolvable:$true] %s35
      %41 = dma.hbm_to_vmem [thread:$0]  %s1, 1024, %s36, [#allocation6], 64, 64, 4
    $region9: #{tpu_custom_call.1} parent=1 // pred_fallthru
      _
    // Predicated region
    $region10: #{tpu_custom_call.1} parent=1 // pred_check
      _
    $region11: #{tpu_custom_call.1} parent=1 // pred_check_branch
      %43 = sbr.rel (0) target = $region13
    $region12: #{tpu_custom_call.1} parent=1 // pred_region
      _
    $region13: #{tpu_custom_call.1} parent=1 // pred_fallthru
      _
    // Predicated region
    $region14: #{tpu_custom_call.1} parent=1 // pred_check
      _
    $region15: #{tpu_custom_call.1} parent=1 // pred_check_branch
      %45 = sbr.rel (0) target = $region17
    $region16: #{tpu_custom_call.1} parent=1 // pred_region
      %s47 = ssub.s32 1024, 1024
      %48 = vsyncadd [#allocation6], %s47
      %s49 = sshll.u32 [#allocation7], 4
      %s50 = int_to_ptr.vmem [resolvable:$true] %s49
      %55 = dma.hbm_to_vmem [thread:$0]  %s3, 1024, %s50, [#allocation6], 64, 64, 4
    $region17: #{tpu_custom_call.1} parent=1 // pred_fallthru
      _
    // Predicated region
    $region18: #{tpu_custom_call.1} parent=1 // pred_check
      _
    $region19: #{tpu_custom_call.1} parent=1 // pred_check_branch
      %57 = sbr.rel (0) target = $region21
    $region20: #{tpu_custom_call.1} parent=1 // pred_region
      _
    $region21: #{tpu_custom_call.1} parent=1 // pred_fallthru
      _
    // Predicated region
    $region22: #{tpu_custom_call.1} parent=1 // pred_check
      _
    $region23: #{tpu_custom_call.1} parent=1 // pred_check_branch
      %59 = sbr.rel (0) target = $region25
    $region24: #{tpu_custom_call.1} parent=1 // pred_region
      %s61 = ssub.s32 1024, 1024
      %62 = vsyncadd [#allocation9], %s61
      %s63 = sshll.u32 [#allocation8], 4
      %s64 = int_to_ptr.vmem [resolvable:$true] %s63
      %69 = dma.hbm_to_vmem [thread:$0]  %s5, 1024, %s64, [#allocation9], 64, 64, 4
    $region25: #{tpu_custom_call.1} parent=1 // pred_fallthru
      _
    // Predicated region
    $region26: #{tpu_custom_call.1} parent=1 // pred_check
      _
    $region27: #{tpu_custom_call.1} parent=1 // pred_check_branch
      %71 = sbr.rel (0) target = $region29
    $region28: #{tpu_custom_call.1} parent=1 // pred_region
      _
    $region29: #{tpu_custom_call.1} parent=1 // pred_fallthru
      _
    // Predicated region
    $region30: #{tpu_custom_call.1} parent=1 // pred_check
      _
    $region31: #{tpu_custom_call.1} parent=1 // pred_check_branch
      %73 = sbr.rel (0) target = $region33
    $region32: #{tpu_custom_call.1} parent=1 // pred_region
      %s75 = ssub.s32 1024, 1024
      %76 = vsyncadd [#allocation9], %s75
      %s77 = sshll.u32 [#allocation10], 4
      %s78 = int_to_ptr.vmem [resolvable:$true] %s77
      %83 = dma.hbm_to_vmem [thread:$0]  %s7, 1024, %s78, [#allocation9], 64, 64, 4
    $region33: #{tpu_custom_call.1} parent=1 // pred_fallthru
      _
    // Predicated region
    $region34: #{tpu_custom_call.1} parent=1 // pred_check
      _
    $region35: #{tpu_custom_call.1} parent=1 // pred_check_branch
      %85 = sbr.rel (0) target = $region37
    $region36: #{tpu_custom_call.1} parent=1 // pred_region
      _
    $region37: #{tpu_custom_call.1} parent=1 // pred_fallthru
      _
    // Predicated region
    $region38: #{tpu_custom_call.1} parent=1 // pred_check
      _
    $region39: #{tpu_custom_call.1} parent=1 // pred_check_branch
      %87 = sbr.rel (0) target = $region41
    $region40: #{tpu_custom_call.1} parent=1 // pred_region
      %88 = dma.done [#allocation3], 1024
    $region41: #{tpu_custom_call.1} parent=1 // pred_fallthru
      _
    // Predicated region
    $region42: #{tpu_custom_call.1} parent=1 // pred_check
      _
    $region43: #{tpu_custom_call.1} parent=1 // pred_check_branch
      %90 = sbr.rel (0) target = $region45
    $region44: #{tpu_custom_call.1} parent=1 // pred_region
      %91 = dma.done [#allocation6], 1024
    $region45: #{tpu_custom_call.1} parent=1 // pred_fallthru
      _
    // Predicated region
    $region46: #{tpu_custom_call.1} parent=1 // pred_check
      _
    $region47: #{tpu_custom_call.1} parent=1 // pred_check_branch
      %93 = sbr.rel (0) target = $region49
    $region48: #{tpu_custom_call.1} parent=1 // pred_region
      %94 = dma.done [#allocation6], 1024
    $region49: #{tpu_custom_call.1} parent=1 // pred_fallthru
      _
    // Predicated region
    $region50: #{tpu_custom_call.1} parent=1 // pred_check
      _
    $region51: #{tpu_custom_call.1} parent=1 // pred_check_branch
      %96 = sbr.rel (0) target = $region53
    $region52: #{tpu_custom_call.1} parent=1 // pred_region
      %97 = dma.done [#allocation9], 1024
    $region53: #{tpu_custom_call.1} parent=1 // pred_fallthru
      _
    // Predicated region
    $region54: #{tpu_custom_call.1} parent=1 // pred_check
      _
    $region55: #{tpu_custom_call.1} parent=1 // pred_check_branch
      %99 = sbr.rel (0) target = $region57
    $region56: #{tpu_custom_call.1} parent=1 // pred_region
      %100 = dma.done [#allocation9], 1024
    $region57: #{tpu_custom_call.1} parent=1 // pred_fallthru
      _
    %v103 = vld [vmem:[%s2] sm:$0x1]
    %v104 = vld [vmem:[%s4] sm:$0x1]
    %v105 = vld [vmem:[%s6] sm:$0x1]
    %v106 = vld [vmem:[%s8] sm:$0x1]
    %v107 = vld [vmem:[#allocation2] sm:$0xf]
    %v108 = vld [vmem:[#allocation2 + $0x4] sm:$0xf]
    %v109 = vld [vmem:[#allocation2 + $0x8] sm:$0xf]
    %v110 = vld [vmem:[#allocation2 + $0xc] sm:$0xf]
    %v111 = vld [vmem:[#allocation2 + $0x10] sm:$0xf]
    %v112 = vld [vmem:[#allocation2 + $0x14] sm:$0xf]
    %v113 = vld [vmem:[#allocation2 + $0x18] sm:$0xf]
    %v114 = vld [vmem:[#allocation2 + $0x1c] sm:$0xf]
    %v115 = vld [vmem:[#allocation2 + $0x20] sm:$0xf]
    %v116 = vld [vmem:[#allocation2 + $0x24] sm:$0xf]
    %v117 = vld [vmem:[#allocation2 + $0x28] sm:$0xf]
    %v118 = vld [vmem:[#allocation2 + $0x2c] sm:$0xf]
    %v119 = vld [vmem:[#allocation2 + $0x30] sm:$0xf]
    %v120 = vld [vmem:[#allocation2 + $0x34] sm:$0xf]
    %v121 = vld [vmem:[#allocation2 + $0x38] sm:$0xf]
    %v122 = vld [vmem:[#allocation2 + $0x3c] sm:$0xf]
    %v123 = vld [vmem:[#allocation5] sm:$0xf]
    %v124 = vld [vmem:[#allocation5 + $0x4] sm:$0xf]
    %v125 = vld [vmem:[#allocation5 + $0x8] sm:$0xf]
    %v126 = vld [vmem:[#allocation5 + $0xc] sm:$0xf]
    %v127 = vld [vmem:[#allocation5 + $0x10] sm:$0xf]
    %v128 = vld [vmem:[#allocation5 + $0x14] sm:$0xf]
    %v129 = vld [vmem:[#allocation5 + $0x18] sm:$0xf]
    %v130 = vld [vmem:[#allocation5 + $0x1c] sm:$0xf]
    %v131 = vld [vmem:[#allocation5 + $0x20] sm:$0xf]
    %v132 = vld [vmem:[#allocation5 + $0x24] sm:$0xf]
    %v133 = vld [vmem:[#allocation5 + $0x28] sm:$0xf]
    %v134 = vld [vmem:[#allocation5 + $0x2c] sm:$0xf]
    %v135 = vld [vmem:[#allocation5 + $0x30] sm:$0xf]
    %v136 = vld [vmem:[#allocation5 + $0x34] sm:$0xf]
    %v137 = vld [vmem:[#allocation5 + $0x38] sm:$0xf]
    %v138 = vld [vmem:[#allocation5 + $0x3c] sm:$0xf]
    %v155 = vunpack.c.l.b16 %v107
    %v156 = vunpack.c.l.b16 %v108
    %v157 = vunpack.c.l.b16 %v109
    %v158 = vunpack.c.l.b16 %v110
    %v159 = vunpack.c.l.b16 %v111
    %v160 = vunpack.c.l.b16 %v112
    %v161 = vunpack.c.l.b16 %v113
    %v162 = vunpack.c.l.b16 %v114
    %v163 = vunpack.c.l.b16 %v115
    %v164 = vunpack.c.l.b16 %v116
    %v165 = vunpack.c.l.b16 %v117
    %v166 = vunpack.c.l.b16 %v118
    %v167 = vunpack.c.l.b16 %v119
    %v168 = vunpack.c.l.b16 %v120
    %v169 = vunpack.c.l.b16 %v121
    %v170 = vunpack.c.l.b16 %v122
    %v171 = vpack.c.b16 %v156, %v155
    %v172 = vpack.c.b16 %v158, %v157
    %v173 = vpack.c.b16 %v160, %v159
    %v174 = vpack.c.b16 %v162, %v161
    %v175 = vpack.c.b16 %v164, %v163
    %v176 = vpack.c.b16 %v166, %v165
    %v177 = vpack.c.b16 %v168, %v167
    %v178 = vpack.c.b16 %v170, %v169
    %v203 = vunpack.c.l.b16 %v123
    %v204 = vunpack.c.l.b16 %v124
    %v205 = vunpack.c.l.b16 %v125
    %v206 = vunpack.c.l.b16 %v126
    %v207 = vunpack.c.l.b16 %v127
    %v208 = vunpack.c.l.b16 %v128
    %v209 = vunpack.c.l.b16 %v129
    %v210 = vunpack.c.l.b16 %v130
    %v211 = vunpack.c.l.b16 %v131
    %v212 = vunpack.c.l.b16 %v132
    %v213 = vunpack.c.l.b16 %v133
    %v214 = vunpack.c.l.b16 %v134
    %v215 = vunpack.c.l.b16 %v135
    %v216 = vunpack.c.l.b16 %v136
    %v217 = vunpack.c.l.b16 %v137
    %v218 = vunpack.c.l.b16 %v138
    %v219 = vpack.c.b16 %v204, %v203
    %v220 = vpack.c.b16 %v206, %v205
    %v221 = vpack.c.b16 %v208, %v207
    %v222 = vpack.c.b16 %v210, %v209
    %v223 = vpack.c.b16 %v212, %v211
    %v224 = vpack.c.b16 %v214, %v213
    %v225 = vpack.c.b16 %v216, %v215
    %v226 = vpack.c.b16 %v218, %v217
    %235 = vmatprep.subr.bf16.mxu0 0
    %236 = vmatpush1.bf16.msra.mxu0 %v219
    %237 = vmatprep.subr.bf16.mxu0 0
    %238 = vmatpush1.bf16.msra.mxu0 %v220
    %239 = vmatprep.subr.bf16.mxu0 0
    %240 = vmatpush1.bf16.msra.mxu0 %v221
    %241 = vmatprep.subr.bf16.mxu0 0
    %242 = vmatpush1.bf16.msra.mxu0 %v222
    %243 = vmatprep.subr.bf16.mxu0 0
    %244 = vmatpush1.bf16.msra.mxu0 %v223
    %245 = vmatprep.subr.bf16.mxu0 0
    %246 = vmatpush1.bf16.msra.mxu0 %v224
    %247 = vmatprep.subr.bf16.mxu0 0
    %248 = vmatpush1.bf16.msra.mxu0 %v225
    %249 = vmatprep.subr.bf16.mxu0 0
    %250 = vmatpush1.bf16.msra.mxu0 %v226
    %251 = vmatprep.subr.bf16.mxu0 0
    %252 = vmatpush1.bf16.msra.mxu0 0
    %253 = vmatprep.subr.bf16.mxu0 0
    %254 = vmatpush1.bf16.msra.mxu0 0
    %255 = vmatprep.subr.bf16.mxu0 0
    %256 = vmatpush1.bf16.msra.mxu0 0
    %257 = vmatprep.subr.bf16.mxu0 0
    %258 = vmatpush1.bf16.msra.mxu0 0
    %259 = vmatprep.subr.bf16.mxu0 0
    %260 = vmatpush1.bf16.msra.mxu0 0
    %261 = vmatprep.subr.bf16.mxu0 0
    %262 = vmatpush1.bf16.msra.mxu0 0
    %263 = vmatprep.subr.bf16.mxu0 0
    %264 = vmatpush1.bf16.msra.mxu0 0
    %265 = vmatprep.subr.bf16.mxu0 0
    %266 = vmatpush1.bf16.msra.mxu0 0
    %267 = vmatprep.mubr.bf16.mxu0 0
    %268 = vmatmul.mubr.bf16.gmra.mrb[0].mxu0 %v171
    %v269 = vpop.f32.mrb[0].mxu0
    %v270 = vadd.f32 0.0, %v269
    %v271 = vpop.f32.mrb[0].mxu0
    %v272 = vpop.f32.mrb[0].mxu0
    %v273 = vadd.f32 0.0, %v272
    %v274 = vpop.f32.mrb[0].mxu0
    %275 = vmatprep.mubr.bf16.mxu0 0
    %276 = vmatmul.mubr.bf16.gmra.mrb[0].mxu0 %v172
    %v277 = vpop.f32.mrb[0].mxu0
    %v278 = vadd.f32 0.0, %v277
    %v279 = vpop.f32.mrb[0].mxu0
    %v280 = vpop.f32.mrb[0].mxu0
    %v281 = vadd.f32 0.0, %v280
    %v282 = vpop.f32.mrb[0].mxu0
    %283 = vmatprep.mubr.bf16.mxu0 0
    %284 = vmatmul.mubr.bf16.gmra.mrb[0].mxu0 %v173
    %v285 = vpop.f32.mrb[0].mxu0
    %v286 = vadd.f32 0.0, %v285
    %v287 = vpop.f32.mrb[0].mxu0
    %v288 = vpop.f32.mrb[0].mxu0
    %v289 = vadd.f32 0.0, %v288
    %v290 = vpop.f32.mrb[0].mxu0
    %291 = vmatprep.mubr.bf16.mxu0 0
    %292 = vmatmul.mubr.bf16.gmra.mrb[0].mxu0 %v174
    %v293 = vpop.f32.mrb[0].mxu0
    %v294 = vadd.f32 0.0, %v293
    %v295 = vpop.f32.mrb[0].mxu0
    %v296 = vpop.f32.mrb[0].mxu0
    %v297 = vadd.f32 0.0, %v296
    %v298 = vpop.f32.mrb[0].mxu0
    %299 = vmatprep.mubr.bf16.mxu0 0
    %300 = vmatmul.mubr.bf16.gmra.mrb[0].mxu0 %v175
    %v301 = vpop.f32.mrb[0].mxu0
    %v302 = vadd.f32 0.0, %v301
    %v303 = vpop.f32.mrb[0].mxu0
    %v304 = vpop.f32.mrb[0].mxu0
    %v305 = vadd.f32 0.0, %v304
    %v306 = vpop.f32.mrb[0].mxu0
    %307 = vmatprep.mubr.bf16.mxu0 0
    %308 = vmatmul.mubr.bf16.gmra.mrb[0].mxu0 %v176
    %v309 = vpop.f32.mrb[0].mxu0
    %v310 = vadd.f32 0.0, %v309
    %v311 = vpop.f32.mrb[0].mxu0
    %v312 = vpop.f32.mrb[0].mxu0
    %v313 = vadd.f32 0.0, %v312
    %v314 = vpop.f32.mrb[0].mxu0
    %315 = vmatprep.mubr.bf16.mxu0 0
    %316 = vmatmul.mubr.bf16.gmra.mrb[0].mxu0 %v177
    %v317 = vpop.f32.mrb[0].mxu0
    %v318 = vadd.f32 0.0, %v317
    %v319 = vpop.f32.mrb[0].mxu0
    %v320 = vpop.f32.mrb[0].mxu0
    %v321 = vadd.f32 0.0, %v320
    %v322 = vpop.f32.mrb[0].mxu0
    %323 = vmatprep.mubr.bf16.mxu0 0
    %324 = vmatmul.mubr.bf16.gmra.mrb[0].mxu0 %v178
    %v325 = vpop.f32.mrb[0].mxu0
    %v326 = vadd.f32 0.0, %v325
    %v327 = vpop.f32.mrb[0].mxu0
    %v328 = vpop.f32.mrb[0].mxu0
    %v329 = vadd.f32 0.0, %v328
    %v330 = vpop.f32.mrb[0].mxu0
    %331 = vdwg.mxu0
    %v332 = vpack.c.bf16 %v273, %v270
    %v333 = vpack.c.bf16 %v281, %v278
    %v334 = vpack.c.bf16 %v289, %v286
    %v335 = vpack.c.bf16 %v297, %v294
    %v336 = vpack.c.bf16 %v305, %v302
    %v337 = vpack.c.bf16 %v313, %v310
    %v338 = vpack.c.bf16 %v321, %v318
    %v339 = vpack.c.bf16 %v329, %v326
    %v341 = vpack.i.b16 %v103, %v103
    %v343 = vlaneseq
    %v344 = vshrl.u32 %v343, 7
    %v345 = vsub.s32 0, %v344
    %v346 = vrot.slane %v341, %v345
    %v347 = vadd.bf16 %v332, %v346
    %v348 = vadd.bf16 %v333, %v346
    %v349 = vadd.bf16 %v334, %v346
    %v350 = vadd.bf16 %v335, %v346
    %v351 = vadd.bf16 %v336, %v346
    %v352 = vadd.bf16 %v337, %v346
    %v353 = vadd.bf16 %v338, %v346
    %v354 = vadd.bf16 %v339, %v346
    %vm355 = vcmp.gt.bf16.partialorder %v347, 0
    %vm356 = vcmp.gt.bf16.partialorder %v348, 0
    %vm357 = vcmp.gt.bf16.partialorder %v349, 0
    %vm358 = vcmp.gt.bf16.partialorder %v350, 0
    %vm359 = vcmp.gt.bf16.partialorder %v351, 0
    %vm360 = vcmp.gt.bf16.partialorder %v352, 0
    %vm361 = vcmp.gt.bf16.partialorder %v353, 0
    %vm362 = vcmp.gt.bf16.partialorder %v354, 0
    %v363 = vmul.bf16 %v347, 1045249613
    %v364 = vmul.bf16 %v348, 1045249613
    %v365 = vmul.bf16 %v349, 1045249613
    %v366 = vmul.bf16 %v350, 1045249613
    %v367 = vmul.bf16 %v351, 1045249613
    %v368 = vmul.bf16 %v352, 1045249613
    %v369 = vmul.bf16 %v353, 1045249613
    %v370 = vmul.bf16 %v354, 1045249613
    %v371 = vsel %vm355, %v347, %v363
    %v372 = vsel %vm356, %v348, %v364
    %v373 = vsel %vm357, %v349, %v365
    %v374 = vsel %vm358, %v350, %v366
    %v375 = vsel %vm359, %v351, %v367
    %v376 = vsel %vm360, %v352, %v368
    %v377 = vsel %vm361, %v353, %v369
    %v378 = vsel %vm362, %v354, %v370
    %v379 = vld [vmem:[#allocation7] sm:$0xf]
    %v380 = vld [vmem:[#allocation7 + $0x4] sm:$0xf]
    %v381 = vld [vmem:[#allocation7 + $0x8] sm:$0xf]
    %v382 = vld [vmem:[#allocation7 + $0xc] sm:$0xf]
    %v383 = vld [vmem:[#allocation7 + $0x10] sm:$0xf]
    %v384 = vld [vmem:[#allocation7 + $0x14] sm:$0xf]
    %v385 = vld [vmem:[#allocation7 + $0x18] sm:$0xf]
    %v386 = vld [vmem:[#allocation7 + $0x1c] sm:$0xf]
    %v387 = vld [vmem:[#allocation7 + $0x20] sm:$0xf]
    %v388 = vld [vmem:[#allocation7 + $0x24] sm:$0xf]
    %v389 = vld [vmem:[#allocation7 + $0x28] sm:$0xf]
    %v390 = vld [vmem:[#allocation7 + $0x2c] sm:$0xf]
    %v391 = vld [vmem:[#allocation7 + $0x30] sm:$0xf]
    %v392 = vld [vmem:[#allocation7 + $0x34] sm:$0xf]
    %v393 = vld [vmem:[#allocation7 + $0x38] sm:$0xf]
    %v394 = vld [vmem:[#allocation7 + $0x3c] sm:$0xf]
    %v411 = vunpack.c.l.b16 %v379
    %v412 = vunpack.c.l.b16 %v380
    %v413 = vunpack.c.l.b16 %v381
    %v414 = vunpack.c.l.b16 %v382
    %v415 = vunpack.c.l.b16 %v383
    %v416 = vunpack.c.l.b16 %v384
    %v417 = vunpack.c.l.b16 %v385
    %v418 = vunpack.c.l.b16 %v386
    %v419 = vunpack.c.l.b16 %v387
    %v420 = vunpack.c.l.b16 %v388
    %v421 = vunpack.c.l.b16 %v389
    %v422 = vunpack.c.l.b16 %v390
    %v423 = vunpack.c.l.b16 %v391
    %v424 = vunpack.c.l.b16 %v392
    %v425 = vunpack.c.l.b16 %v393
    %v426 = vunpack.c.l.b16 %v394
    %v427 = vpack.c.b16 %v412, %v411
    %v428 = vpack.c.b16 %v414, %v413
    %v429 = vpack.c.b16 %v416, %v415
    %v430 = vpack.c.b16 %v418, %v417
    %v431 = vpack.c.b16 %v420, %v419
    %v432 = vpack.c.b16 %v422, %v421
    %v433 = vpack.c.b16 %v424, %v423
    %v434 = vpack.c.b16 %v426, %v425
    %443 = vmatprep.subr.bf16.mxu0 0
    %444 = vmatpush1.bf16.msra.mxu0 %v427
    %445 = vmatprep.subr.bf16.mxu0 0
    %446 = vmatpush1.bf16.msra.mxu0 %v428
    %447 = vmatprep.subr.bf16.mxu0 0
    %448 = vmatpush1.bf16.msra.mxu0 %v429
    %449 = vmatprep.subr.bf16.mxu0 0
    %450 = vmatpush1.bf16.msra.mxu0 %v430
    %451 = vmatprep.subr.bf16.mxu0 0
    %452 = vmatpush1.bf16.msra.mxu0 %v431
    %453 = vmatprep.subr.bf16.mxu0 0
    %454 = vmatpush1.bf16.msra.mxu0 %v432
    %455 = vmatprep.subr.bf16.mxu0 0
    %456 = vmatpush1.bf16.msra.mxu0 %v433
    %457 = vmatprep.subr.bf16.mxu0 0
    %458 = vmatpush1.bf16.msra.mxu0 %v434
    %459 = vmatprep.subr.bf16.mxu0 0
    %460 = vmatpush1.bf16.msra.mxu0 0
    %461 = vmatprep.subr.bf16.mxu0 0
    %462 = vmatpush1.bf16.msra.mxu0 0
    %463 = vmatprep.subr.bf16.mxu0 0
    %464 = vmatpush1.bf16.msra.mxu0 0
    %465 = vmatprep.subr.bf16.mxu0 0
    %466 = vmatpush1.bf16.msra.mxu0 0
    %467 = vmatprep.subr.bf16.mxu0 0
    %468 = vmatpush1.bf16.msra.mxu0 0
    %469 = vmatprep.subr.bf16.mxu0 0
    %470 = vmatpush1.bf16.msra.mxu0 0
    %471 = vmatprep.subr.bf16.mxu0 0
    %472 = vmatpush1.bf16.msra.mxu0 0
    %473 = vmatprep.subr.bf16.mxu0 0
    %474 = vmatpush1.bf16.msra.mxu0 0
    %475 = vmatprep.mubr.bf16.mxu0 0
    %476 = vmatmul.mubr.bf16.gmra.mrb[0].mxu0 %v371
    %v477 = vpop.f32.mrb[0].mxu0
    %v478 = vadd.f32 0.0, %v477
    %v479 = vpop.f32.mrb[0].mxu0
    %v480 = vpop.f32.mrb[0].mxu0
    %v481 = vadd.f32 0.0, %v480
    %v482 = vpop.f32.mrb[0].mxu0
    %483 = vmatprep.mubr.bf16.mxu0 0
    %484 = vmatmul.mubr.bf16.gmra.mrb[0].mxu0 %v372
    %v485 = vpop.f32.mrb[0].mxu0
    %v486 = vadd.f32 0.0, %v485
    %v487 = vpop.f32.mrb[0].mxu0
    %v488 = vpop.f32.mrb[0].mxu0
    %v489 = vadd.f32 0.0, %v488
    %v490 = vpop.f32.mrb[0].mxu0
    %491 = vmatprep.mubr.bf16.mxu0 0
    %492 = vmatmul.mubr.bf16.gmra.mrb[0].mxu0 %v373
    %v493 = vpop.f32.mrb[0].mxu0
    %v494 = vadd.f32 0.0, %v493
    %v495 = vpop.f32.mrb[0].mxu0
    %v496 = vpop.f32.mrb[0].mxu0
    %v497 = vadd.f32 0.0, %v496
    %v498 = vpop.f32.mrb[0].mxu0
    %499 = vmatprep.mubr.bf16.mxu0 0
    %500 = vmatmul.mubr.bf16.gmra.mrb[0].mxu0 %v374
    %v501 = vpop.f32.mrb[0].mxu0
    %v502 = vadd.f32 0.0, %v501
    %v503 = vpop.f32.mrb[0].mxu0
    %v504 = vpop.f32.mrb[0].mxu0
    %v505 = vadd.f32 0.0, %v504
    %v506 = vpop.f32.mrb[0].mxu0
    %507 = vmatprep.mubr.bf16.mxu0 0
    %508 = vmatmul.mubr.bf16.gmra.mrb[0].mxu0 %v375
    %v509 = vpop.f32.mrb[0].mxu0
    %v510 = vadd.f32 0.0, %v509
    %v511 = vpop.f32.mrb[0].mxu0
    %v512 = vpop.f32.mrb[0].mxu0
    %v513 = vadd.f32 0.0, %v512
    %v514 = vpop.f32.mrb[0].mxu0
    %515 = vmatprep.mubr.bf16.mxu0 0
    %516 = vmatmul.mubr.bf16.gmra.mrb[0].mxu0 %v376
    %v517 = vpop.f32.mrb[0].mxu0
    %v518 = vadd.f32 0.0, %v517
    %v519 = vpop.f32.mrb[0].mxu0
    %v520 = vpop.f32.mrb[0].mxu0
    %v521 = vadd.f32 0.0, %v520
    %v522 = vpop.f32.mrb[0].mxu0
    %523 = vmatprep.mubr.bf16.mxu0 0
    %524 = vmatmul.mubr.bf16.gmra.mrb[0].mxu0 %v377
    %v525 = vpop.f32.mrb[0].mxu0
    %v526 = vadd.f32 0.0, %v525
    %v527 = vpop.f32.mrb[0].mxu0
    %v528 = vpop.f32.mrb[0].mxu0
    %v529 = vadd.f32 0.0, %v528
    %v530 = vpop.f32.mrb[0].mxu0
    %531 = vmatprep.mubr.bf16.mxu0 0
    %532 = vmatmul.mubr.bf16.gmra.mrb[0].mxu0 %v378
    %v533 = vpop.f32.mrb[0].mxu0
    %v534 = vadd.f32 0.0, %v533
    %v535 = vpop.f32.mrb[0].mxu0
    %v536 = vpop.f32.mrb[0].mxu0
    %v537 = vadd.f32 0.0, %v536
    %v538 = vpop.f32.mrb[0].mxu0
    %539 = vdwg.mxu0
    %v540 = vpack.c.bf16 %v481, %v478
    %v541 = vpack.c.bf16 %v489, %v486
    %v542 = vpack.c.bf16 %v497, %v494
    %v543 = vpack.c.bf16 %v505, %v502
    %v544 = vpack.c.bf16 %v513, %v510
    %v545 = vpack.c.bf16 %v521, %v518
    %v546 = vpack.c.bf16 %v529, %v526
    %v547 = vpack.c.bf16 %v537, %v534
    %v549 = vpack.i.b16 %v104, %v104
    %v551 = vlaneseq
    %v552 = vshrl.u32 %v551, 7
    %v553 = vsub.s32 0, %v552
    %v554 = vrot.slane %v549, %v553
    %v555 = vadd.bf16 %v540, %v554
    %v556 = vadd.bf16 %v541, %v554
    %v557 = vadd.bf16 %v542, %v554
    %v558 = vadd.bf16 %v543, %v554
    %v559 = vadd.bf16 %v544, %v554
    %v560 = vadd.bf16 %v545, %v554
    %v561 = vadd.bf16 %v546, %v554
    %v562 = vadd.bf16 %v547, %v554
    %vm563 = vcmp.gt.bf16.partialorder %v555, 0
    %vm564 = vcmp.gt.bf16.partialorder %v556, 0
    %vm565 = vcmp.gt.bf16.partialorder %v557, 0
    %vm566 = vcmp.gt.bf16.partialorder %v558, 0
    %vm567 = vcmp.gt.bf16.partialorder %v559, 0
    %vm568 = vcmp.gt.bf16.partialorder %v560, 0
    %vm569 = vcmp.gt.bf16.partialorder %v561, 0
    %vm570 = vcmp.gt.bf16.partialorder %v562, 0
    %v571 = vmul.bf16 %v555, 1045249613
    %v572 = vmul.bf16 %v556, 1045249613
    %v573 = vmul.bf16 %v557, 1045249613
    %v574 = vmul.bf16 %v558, 1045249613
    %v575 = vmul.bf16 %v559, 1045249613
    %v576 = vmul.bf16 %v560, 1045249613
    %v577 = vmul.bf16 %v561, 1045249613
    %v578 = vmul.bf16 %v562, 1045249613
    %v579 = vsel %vm563, %v555, %v571
    %v580 = vsel %vm564, %v556, %v572
    %v581 = vsel %vm565, %v557, %v573
    %v582 = vsel %vm566, %v558, %v574
    %v583 = vsel %vm567, %v559, %v575
    %v584 = vsel %vm568, %v560, %v576
    %v585 = vsel %vm569, %v561, %v577
    %v586 = vsel %vm570, %v562, %v578
    %v587 = vld [vmem:[#allocation8] sm:$0xf]
    %v588 = vld [vmem:[#allocation8 + $0x4] sm:$0xf]
    %v589 = vld [vmem:[#allocation8 + $0x8] sm:$0xf]
    %v590 = vld [vmem:[#allocation8 + $0xc] sm:$0xf]
    %v591 = vld [vmem:[#allocation8 + $0x10] sm:$0xf]
    %v592 = vld [vmem:[#allocation8 + $0x14] sm:$0xf]
    %v593 = vld [vmem:[#allocation8 + $0x18] sm:$0xf]
    %v594 = vld [vmem:[#allocation8 + $0x1c] sm:$0xf]
    %v595 = vld [vmem:[#allocation8 + $0x20] sm:$0xf]
    %v596 = vld [vmem:[#allocation8 + $0x24] sm:$0xf]
    %v597 = vld [vmem:[#allocation8 + $0x28] sm:$0xf]
    %v598 = vld [vmem:[#allocation8 + $0x2c] sm:$0xf]
    %v599 = vld [vmem:[#allocation8 + $0x30] sm:$0xf]
    %v600 = vld [vmem:[#allocation8 + $0x34] sm:$0xf]
    %v601 = vld [vmem:[#allocation8 + $0x38] sm:$0xf]
    %v602 = vld [vmem:[#allocation8 + $0x3c] sm:$0xf]
    %v619 = vunpack.c.l.b16 %v587
    %v620 = vunpack.c.l.b16 %v588
    %v621 = vunpack.c.l.b16 %v589
    %v622 = vunpack.c.l.b16 %v590
    %v623 = vunpack.c.l.b16 %v591
    %v624 = vunpack.c.l.b16 %v592
    %v625 = vunpack.c.l.b16 %v593
    %v626 = vunpack.c.l.b16 %v594
    %v627 = vunpack.c.l.b16 %v595
    %v628 = vunpack.c.l.b16 %v596
    %v629 = vunpack.c.l.b16 %v597
    %v630 = vunpack.c.l.b16 %v598
    %v631 = vunpack.c.l.b16 %v599
    %v632 = vunpack.c.l.b16 %v600
    %v633 = vunpack.c.l.b16 %v601
    %v634 = vunpack.c.l.b16 %v602
    %v635 = vpack.c.b16 %v620, %v619
    %v636 = vpack.c.b16 %v622, %v621
    %v637 = vpack.c.b16 %v624, %v623
    %v638 = vpack.c.b16 %v626, %v625
    %v639 = vpack.c.b16 %v628, %v627
    %v640 = vpack.c.b16 %v630, %v629
    %v641 = vpack.c.b16 %v632, %v631
    %v642 = vpack.c.b16 %v634, %v633
    %651 = vmatprep.subr.bf16.mxu0 0
    %652 = vmatpush1.bf16.msra.mxu0 %v635
    %653 = vmatprep.subr.bf16.mxu0 0
    %654 = vmatpush1.bf16.msra.mxu0 %v636
    %655 = vmatprep.subr.bf16.mxu0 0
    %656 = vmatpush1.bf16.msra.mxu0 %v637
    %657 = vmatprep.subr.bf16.mxu0 0
    %658 = vmatpush1.bf16.msra.mxu0 %v638
    %659 = vmatprep.subr.bf16.mxu0 0
    %660 = vmatpush1.bf16.msra.mxu0 %v639
    %661 = vmatprep.subr.bf16.mxu0 0
    %662 = vmatpush1.bf16.msra.mxu0 %v640
    %663 = vmatprep.subr.bf16.mxu0 0
    %664 = vmatpush1.bf16.msra.mxu0 %v641
    %665 = vmatprep.subr.bf16.mxu0 0
    %666 = vmatpush1.bf16.msra.mxu0 %v642
    %667 = vmatprep.subr.bf16.mxu0 0
    %668 = vmatpush1.bf16.msra.mxu0 0
    %669 = vmatprep.subr.bf16.mxu0 0
    %670 = vmatpush1.bf16.msra.mxu0 0
    %671 = vmatprep.subr.bf16.mxu0 0
    %672 = vmatpush1.bf16.msra.mxu0 0
    %673 = vmatprep.subr.bf16.mxu0 0
    %674 = vmatpush1.bf16.msra.mxu0 0
    %675 = vmatprep.subr.bf16.mxu0 0
    %676 = vmatpush1.bf16.msra.mxu0 0
    %677 = vmatprep.subr.bf16.mxu0 0
    %678 = vmatpush1.bf16.msra.mxu0 0
    %679 = vmatprep.subr.bf16.mxu0 0
    %680 = vmatpush1.bf16.msra.mxu0 0
    %681 = vmatprep.subr.bf16.mxu0 0
    %682 = vmatpush1.bf16.msra.mxu0 0
    %683 = vmatprep.mubr.bf16.mxu0 0
    %684 = vmatmul.mubr.bf16.gmra.mrb[0].mxu0 %v579
    %v685 = vpop.f32.mrb[0].mxu0
    %v686 = vadd.f32 0.0, %v685
    %v687 = vpop.f32.mrb[0].mxu0
    %v688 = vpop.f32.mrb[0].mxu0
    %v689 = vadd.f32 0.0, %v688
    %v690 = vpop.f32.mrb[0].mxu0
    %691 = vmatprep.mubr.bf16.mxu0 0
    %692 = vmatmul.mubr.bf16.gmra.mrb[0].mxu0 %v580
    %v693 = vpop.f32.mrb[0].mxu0
    %v694 = vadd.f32 0.0, %v693
    %v695 = vpop.f32.mrb[0].mxu0
    %v696 = vpop.f32.mrb[0].mxu0
    %v697 = vadd.f32 0.0, %v696
    %v698 = vpop.f32.mrb[0].mxu0
    %699 = vmatprep.mubr.bf16.mxu0 0
    %700 = vmatmul.mubr.bf16.gmra.mrb[0].mxu0 %v581
    %v701 = vpop.f32.mrb[0].mxu0
    %v702 = vadd.f32 0.0, %v701
    %v703 = vpop.f32.mrb[0].mxu0
    %v704 = vpop.f32.mrb[0].mxu0
    %v705 = vadd.f32 0.0, %v704
    %v706 = vpop.f32.mrb[0].mxu0
    %707 = vmatprep.mubr.bf16.mxu0 0
    %708 = vmatmul.mubr.bf16.gmra.mrb[0].mxu0 %v582
    %v709 = vpop.f32.mrb[0].mxu0
    %v710 = vadd.f32 0.0, %v709
    %v711 = vpop.f32.mrb[0].mxu0
    %v712 = vpop.f32.mrb[0].mxu0
    %v713 = vadd.f32 0.0, %v712
    %v714 = vpop.f32.mrb[0].mxu0
    %715 = vmatprep.mubr.bf16.mxu0 0
    %716 = vmatmul.mubr.bf16.gmra.mrb[0].mxu0 %v583
    %v717 = vpop.f32.mrb[0].mxu0
    %v718 = vadd.f32 0.0, %v717
    %v719 = vpop.f32.mrb[0].mxu0
    %v720 = vpop.f32.mrb[0].mxu0
    %v721 = vadd.f32 0.0, %v720
    %v722 = vpop.f32.mrb[0].mxu0
    %723 = vmatprep.mubr.bf16.mxu0 0
    %724 = vmatmul.mubr.bf16.gmra.mrb[0].mxu0 %v584
    %v725 = vpop.f32.mrb[0].mxu0
    %v726 = vadd.f32 0.0, %v725
    %v727 = vpop.f32.mrb[0].mxu0
    %v728 = vpop.f32.mrb[0].mxu0
    %v729 = vadd.f32 0.0, %v728
    %v730 = vpop.f32.mrb[0].mxu0
    %731 = vmatprep.mubr.bf16.mxu0 0
    %732 = vmatmul.mubr.bf16.gmra.mrb[0].mxu0 %v585
    %v733 = vpop.f32.mrb[0].mxu0
    %v734 = vadd.f32 0.0, %v733
    %v735 = vpop.f32.mrb[0].mxu0
    %v736 = vpop.f32.mrb[0].mxu0
    %v737 = vadd.f32 0.0, %v736
    %v738 = vpop.f32.mrb[0].mxu0
    %739 = vmatprep.mubr.bf16.mxu0 0
    %740 = vmatmul.mubr.bf16.gmra.mrb[0].mxu0 %v586
    %v741 = vpop.f32.mrb[0].mxu0
    %v742 = vadd.f32 0.0, %v741
    %v743 = vpop.f32.mrb[0].mxu0
    %v744 = vpop.f32.mrb[0].mxu0
    %v745 = vadd.f32 0.0, %v744
    %v746 = vpop.f32.mrb[0].mxu0
    %747 = vdwg.mxu0
    %v748 = vpack.c.bf16 %v689, %v686
    %v749 = vpack.c.bf16 %v697, %v694
    %v750 = vpack.c.bf16 %v705, %v702
    %v751 = vpack.c.bf16 %v713, %v710
    %v752 = vpack.c.bf16 %v721, %v718
    %v753 = vpack.c.bf16 %v729, %v726
    %v754 = vpack.c.bf16 %v737, %v734
    %v755 = vpack.c.bf16 %v745, %v742
    %v757 = vpack.i.b16 %v105, %v105
    %v759 = vlaneseq
    %v760 = vshrl.u32 %v759, 7
    %v761 = vsub.s32 0, %v760
    %v762 = vrot.slane %v757, %v761
    %v763 = vadd.bf16 %v748, %v762
    %v764 = vadd.bf16 %v749, %v762
    %v765 = vadd.bf16 %v750, %v762
    %v766 = vadd.bf16 %v751, %v762
    %v767 = vadd.bf16 %v752, %v762
    %v768 = vadd.bf16 %v753, %v762
    %v769 = vadd.bf16 %v754, %v762
    %v770 = vadd.bf16 %v755, %v762
    %vm771 = vcmp.gt.bf16.partialorder %v763, 0
    %vm772 = vcmp.gt.bf16.partialorder %v764, 0
    %vm773 = vcmp.gt.bf16.partialorder %v765, 0
    %vm774 = vcmp.gt.bf16.partialorder %v766, 0
    %vm775 = vcmp.gt.bf16.partialorder %v767, 0
    %vm776 = vcmp.gt.bf16.partialorder %v768, 0
    %vm777 = vcmp.gt.bf16.partialorder %v769, 0
    %vm778 = vcmp.gt.bf16.partialorder %v770, 0
    %v779 = vmul.bf16 %v763, 1045249613
    %v780 = vmul.bf16 %v764, 1045249613
    %v781 = vmul.bf16 %v765, 1045249613
    %v782 = vmul.bf16 %v766, 1045249613
    %v783 = vmul.bf16 %v767, 1045249613
    %v784 = vmul.bf16 %v768, 1045249613
    %v785 = vmul.bf16 %v769, 1045249613
    %v786 = vmul.bf16 %v770, 1045249613
    %v787 = vsel %vm771, %v763, %v779
    %v788 = vsel %vm772, %v764, %v780
    %v789 = vsel %vm773, %v765, %v781
    %v790 = vsel %vm774, %v766, %v782
    %v791 = vsel %vm775, %v767, %v783
    %v792 = vsel %vm776, %v768, %v784
    %v793 = vsel %vm777, %v769, %v785
    %v794 = vsel %vm778, %v770, %v786
    %v795 = vld [vmem:[#allocation10] sm:$0xf]
    %v796 = vld [vmem:[#allocation10 + $0x4] sm:$0xf]
    %v797 = vld [vmem:[#allocation10 + $0x8] sm:$0xf]
    %v798 = vld [vmem:[#allocation10 + $0xc] sm:$0xf]
    %v799 = vld [vmem:[#allocation10 + $0x10] sm:$0xf]
    %v800 = vld [vmem:[#allocation10 + $0x14] sm:$0xf]
    %v801 = vld [vmem:[#allocation10 + $0x18] sm:$0xf]
    %v802 = vld [vmem:[#allocation10 + $0x1c] sm:$0xf]
    %v803 = vld [vmem:[#allocation10 + $0x20] sm:$0xf]
    %v804 = vld [vmem:[#allocation10 + $0x24] sm:$0xf]
    %v805 = vld [vmem:[#allocation10 + $0x28] sm:$0xf]
    %v806 = vld [vmem:[#allocation10 + $0x2c] sm:$0xf]
    %v807 = vld [vmem:[#allocation10 + $0x30] sm:$0xf]
    %v808 = vld [vmem:[#allocation10 + $0x34] sm:$0xf]
    %v809 = vld [vmem:[#allocation10 + $0x38] sm:$0xf]
    %v810 = vld [vmem:[#allocation10 + $0x3c] sm:$0xf]
    %v827 = vunpack.c.l.b16 %v795
    %v828 = vunpack.c.l.b16 %v796
    %v829 = vunpack.c.l.b16 %v797
    %v830 = vunpack.c.l.b16 %v798
    %v831 = vunpack.c.l.b16 %v799
    %v832 = vunpack.c.l.b16 %v800
    %v833 = vunpack.c.l.b16 %v801
    %v834 = vunpack.c.l.b16 %v802
    %v835 = vunpack.c.l.b16 %v803
    %v836 = vunpack.c.l.b16 %v804
    %v837 = vunpack.c.l.b16 %v805
    %v838 = vunpack.c.l.b16 %v806
    %v839 = vunpack.c.l.b16 %v807
    %v840 = vunpack.c.l.b16 %v808
    %v841 = vunpack.c.l.b16 %v809
    %v842 = vunpack.c.l.b16 %v810
    %v843 = vpack.c.b16 %v828, %v827
    %v844 = vpack.c.b16 %v830, %v829
    %v845 = vpack.c.b16 %v832, %v831
    %v846 = vpack.c.b16 %v834, %v833
    %v847 = vpack.c.b16 %v836, %v835
    %v848 = vpack.c.b16 %v838, %v837
    %v849 = vpack.c.b16 %v840, %v839
    %v850 = vpack.c.b16 %v842, %v841
    %859 = vmatprep.subr.bf16.mxu0 0
    %860 = vmatpush1.bf16.msra.mxu0 %v843
    %861 = vmatprep.subr.bf16.mxu0 0
    %862 = vmatpush1.bf16.msra.mxu0 %v844
    %863 = vmatprep.subr.bf16.mxu0 0
    %864 = vmatpush1.bf16.msra.mxu0 %v845
    %865 = vmatprep.subr.bf16.mxu0 0
    %866 = vmatpush1.bf16.msra.mxu0 %v846
    %867 = vmatprep.subr.bf16.mxu0 0
    %868 = vmatpush1.bf16.msra.mxu0 %v847
    %869 = vmatprep.subr.bf16.mxu0 0
    %870 = vmatpush1.bf16.msra.mxu0 %v848
    %871 = vmatprep.subr.bf16.mxu0 0
    %872 = vmatpush1.bf16.msra.mxu0 %v849
    %873 = vmatprep.subr.bf16.mxu0 0
    %874 = vmatpush1.bf16.msra.mxu0 %v850
    %875 = vmatprep.subr.bf16.mxu0 0
    %876 = vmatpush1.bf16.msra.mxu0 0
    %877 = vmatprep.subr.bf16.mxu0 0
    %878 = vmatpush1.bf16.msra.mxu0 0
    %879 = vmatprep.subr.bf16.mxu0 0
    %880 = vmatpush1.bf16.msra.mxu0 0
    %881 = vmatprep.subr.bf16.mxu0 0
    %882 = vmatpush1.bf16.msra.mxu0 0
    %883 = vmatprep.subr.bf16.mxu0 0
    %884 = vmatpush1.bf16.msra.mxu0 0
    %885 = vmatprep.subr.bf16.mxu0 0
    %886 = vmatpush1.bf16.msra.mxu0 0
    %887 = vmatprep.subr.bf16.mxu0 0
    %888 = vmatpush1.bf16.msra.mxu0 0
    %889 = vmatprep.subr.bf16.mxu0 0
    %890 = vmatpush1.bf16.msra.mxu0 0
    %891 = vmatprep.mubr.bf16.mxu0 0
    %892 = vmatmul.mubr.bf16.gmra.mrb[0].mxu0 %v787
    %v893 = vpop.f32.mrb[0].mxu0
    %v894 = vadd.f32 0.0, %v893
    %v895 = vpop.f32.mrb[0].mxu0
    %v896 = vpop.f32.mrb[0].mxu0
    %v897 = vadd.f32 0.0, %v896
    %v898 = vpop.f32.mrb[0].mxu0
    %899 = vmatprep.mubr.bf16.mxu0 0
    %900 = vmatmul.mubr.bf16.gmra.mrb[0].mxu0 %v788
    %v901 = vpop.f32.mrb[0].mxu0
    %v902 = vadd.f32 0.0, %v901
    %v903 = vpop.f32.mrb[0].mxu0
    %v904 = vpop.f32.mrb[0].mxu0
    %v905 = vadd.f32 0.0, %v904
    %v906 = vpop.f32.mrb[0].mxu0
    %907 = vmatprep.mubr.bf16.mxu0 0
    %908 = vmatmul.mubr.bf16.gmra.mrb[0].mxu0 %v789
    %v909 = vpop.f32.mrb[0].mxu0
    %v910 = vadd.f32 0.0, %v909
    %v911 = vpop.f32.mrb[0].mxu0
    %v912 = vpop.f32.mrb[0].mxu0
    %v913 = vadd.f32 0.0, %v912
    %v914 = vpop.f32.mrb[0].mxu0
    %915 = vmatprep.mubr.bf16.mxu0 0
    %916 = vmatmul.mubr.bf16.gmra.mrb[0].mxu0 %v790
    %v917 = vpop.f32.mrb[0].mxu0
    %v918 = vadd.f32 0.0, %v917
    %v919 = vpop.f32.mrb[0].mxu0
    %v920 = vpop.f32.mrb[0].mxu0
    %v921 = vadd.f32 0.0, %v920
    %v922 = vpop.f32.mrb[0].mxu0
    %923 = vmatprep.mubr.bf16.mxu0 0
    %924 = vmatmul.mubr.bf16.gmra.mrb[0].mxu0 %v791
    %v925 = vpop.f32.mrb[0].mxu0
    %v926 = vadd.f32 0.0, %v925
    %v927 = vpop.f32.mrb[0].mxu0
    %v928 = vpop.f32.mrb[0].mxu0
    %v929 = vadd.f32 0.0, %v928
    %v930 = vpop.f32.mrb[0].mxu0
    %931 = vmatprep.mubr.bf16.mxu0 0
    %932 = vmatmul.mubr.bf16.gmra.mrb[0].mxu0 %v792
    %v933 = vpop.f32.mrb[0].mxu0
    %v934 = vadd.f32 0.0, %v933
    %v935 = vpop.f32.mrb[0].mxu0
    %v936 = vpop.f32.mrb[0].mxu0
    %v937 = vadd.f32 0.0, %v936
    %v938 = vpop.f32.mrb[0].mxu0
    %939 = vmatprep.mubr.bf16.mxu0 0
    %940 = vmatmul.mubr.bf16.gmra.mrb[0].mxu0 %v793
    %v941 = vpop.f32.mrb[0].mxu0
    %v942 = vadd.f32 0.0, %v941
    %v943 = vpop.f32.mrb[0].mxu0
    %v944 = vpop.f32.mrb[0].mxu0
    %v945 = vadd.f32 0.0, %v944
    %v946 = vpop.f32.mrb[0].mxu0
    %947 = vmatprep.mubr.bf16.mxu0 0
    %948 = vmatmul.mubr.bf16.gmra.mrb[0].mxu0 %v794
    %v949 = vpop.f32.mrb[0].mxu0
    %v950 = vadd.f32 0.0, %v949
    %v951 = vpop.f32.mrb[0].mxu0
    %v952 = vpop.f32.mrb[0].mxu0
    %v953 = vadd.f32 0.0, %v952
    %v954 = vpop.f32.mrb[0].mxu0
    %955 = vdwg.mxu0
    %v956 = vpack.c.bf16 %v897, %v894
    %v957 = vpack.c.bf16 %v905, %v902
    %v958 = vpack.c.bf16 %v913, %v910
    %v959 = vpack.c.bf16 %v921, %v918
    %v960 = vpack.c.bf16 %v929, %v926
    %v961 = vpack.c.bf16 %v937, %v934
    %v962 = vpack.c.bf16 %v945, %v942
    %v963 = vpack.c.bf16 %v953, %v950
    %v965 = vpack.i.b16 %v106, %v106
    %v967 = vlaneseq
    %v968 = vshrl.u32 %v967, 7
    %v969 = vsub.s32 0, %v968
    %v970 = vrot.slane %v965, %v969
    %v971 = vadd.bf16 %v956, %v970
    %v972 = vadd.bf16 %v957, %v970
    %v973 = vadd.bf16 %v958, %v970
    %v974 = vadd.bf16 %v959, %v970
    %v975 = vadd.bf16 %v960, %v970
    %v976 = vadd.bf16 %v961, %v970
    %v977 = vadd.bf16 %v962, %v970
    %v978 = vadd.bf16 %v963, %v970
    %v979 = vtanh.bf16.pop %v971
    %v980 = vtanh.bf16.pop %v972
    %v981 = vtanh.bf16.pop %v973
    %v982 = vtanh.bf16.pop %v974
    %v983 = vtanh.bf16.pop %v975
    %v984 = vtanh.bf16.pop %v976
    %v985 = vtanh.bf16.pop %v977
    %v986 = vtanh.bf16.pop %v978
    %v995 = vunpack.c.l.b16 %v979
    %v996 = vunpack.c.h.b16 %v979
    %v997 = vunpack.c.l.b16 %v980
    %v998 = vunpack.c.h.b16 %v980
    %v999 = vunpack.c.l.b16 %v981
    %v1000 = vunpack.c.h.b16 %v981
    %v1001 = vunpack.c.l.b16 %v982
    %v1002 = vunpack.c.h.b16 %v982
    %v1003 = vunpack.c.l.b16 %v983
    %v1004 = vunpack.c.h.b16 %v983
    %v1005 = vunpack.c.l.b16 %v984
    %v1006 = vunpack.c.h.b16 %v984
    %v1007 = vunpack.c.l.b16 %v985
    %v1008 = vunpack.c.h.b16 %v985
    %v1009 = vunpack.c.l.b16 %v986
    %v1010 = vunpack.c.h.b16 %v986
    %v1011 = vpack.c.b16 %v995, %v995
    %v1012 = vpack.c.b16 %v996, %v996
    %v1013 = vpack.c.b16 %v997, %v997
    %v1014 = vpack.c.b16 %v998, %v998
    %v1015 = vpack.c.b16 %v999, %v999
    %v1016 = vpack.c.b16 %v1000, %v1000
    %v1017 = vpack.c.b16 %v1001, %v1001
    %v1018 = vpack.c.b16 %v1002, %v1002
    %v1019 = vpack.c.b16 %v1003, %v1003
    %v1020 = vpack.c.b16 %v1004, %v1004
    %v1021 = vpack.c.b16 %v1005, %v1005
    %v1022 = vpack.c.b16 %v1006, %v1006
    %v1023 = vpack.c.b16 %v1007, %v1007
    %v1024 = vpack.c.b16 %v1008, %v1008
    %v1025 = vpack.c.b16 %v1009, %v1009
    %v1026 = vpack.c.b16 %v1010, %v1010
    %1043 = vst [vmem:[#allocation11] sm:$0xf] %v1011
    %1044 = vst [vmem:[#allocation11 + $0x4] sm:$0xf] %v1012
    %1045 = vst [vmem:[#allocation11 + $0x8] sm:$0xf] %v1013
    %1046 = vst [vmem:[#allocation11 + $0xc] sm:$0xf] %v1014
    %1047 = vst [vmem:[#allocation11 + $0x10] sm:$0xf] %v1015
    %1048 = vst [vmem:[#allocation11 + $0x14] sm:$0xf] %v1016
    %1049 = vst [vmem:[#allocation11 + $0x18] sm:$0xf] %v1017
    %1050 = vst [vmem:[#allocation11 + $0x1c] sm:$0xf] %v1018
    %1051 = vst [vmem:[#allocation11 + $0x20] sm:$0xf] %v1019
    %1052 = vst [vmem:[#allocation11 + $0x24] sm:$0xf] %v1020
    %1053 = vst [vmem:[#allocation11 + $0x28] sm:$0xf] %v1021
    %1054 = vst [vmem:[#allocation11 + $0x2c] sm:$0xf] %v1022
    %1055 = vst [vmem:[#allocation11 + $0x30] sm:$0xf] %v1023
    %1056 = vst [vmem:[#allocation11 + $0x34] sm:$0xf] %v1024
    %1057 = vst [vmem:[#allocation11 + $0x38] sm:$0xf] %v1025
    %1058 = vst [vmem:[#allocation11 + $0x3c] sm:$0xf] %v1026
    // Predicated region
    $region58: #{tpu_custom_call.1} parent=1 // pred_check
      _
    $region59: #{tpu_custom_call.1} parent=1 // pred_check_branch
      %1060 = sbr.rel (0) target = $region61
    $region60: #{tpu_custom_call.1} parent=1 // pred_region
      %s1062 = ssub.s32 1024, 1024
      %1063 = vsyncadd [#allocation4], %s1062
      %s1064 = sshll.u32 [#allocation11], 4
      %s1065 = int_to_ptr.vmem [resolvable:$true] %s1064
      %1070 = dma.vmem_to_hbm [thread:$0]  %s1065, 1024, %s9, [#allocation4], 64, 64, 4
    $region61: #{tpu_custom_call.1} parent=1 // pred_fallthru
      _
    // Predicated region
    $region62: #{tpu_custom_call.1} parent=1 // pred_check
      _
    $region63: #{tpu_custom_call.1} parent=1 // pred_check_branch
      %1072 = sbr.rel (0) target = $region65
    $region64: #{tpu_custom_call.1} parent=1 // pred_region
      %1073 = dma.done [#allocation4], 1024
    $region65: #{tpu_custom_call.1} parent=1 // pred_fallthru
      _
    %1074 = vsyncpa [#allocation3], 1
    %1075 = vsyncpa [#allocation6], 1
    %1076 = vsyncpa [#allocation9], 1
    %1077 = vsyncpa [#allocation4], 1

</llo_original>
